<compile_context>
chip_gen: v6e
topology: v6e:2x2x1
jax: 0.10.0
libtpu: 0.0.40
codegen_flags: <defaults>
</compile_context>

<pallas_src>
import math
from functools import partial

import jax
import jax.numpy as jnp
import numpy as np
from jax.experimental import pallas as pl
from jax.experimental.pallas import tpu as pltpu


def _round_up(x: int, m: int) -> int:
    return (x + m - 1) // m * m


# ---------------------------------------------------------------------------
# Pallas kernel: one batch tile -> [action, log_prob, entropy, value] per row
# ---------------------------------------------------------------------------
def ac_kernel(state_ref, gumbel_ref, w1_ref, w2_ref, out_ref):
    S = state_ref.shape[1]
    H2 = w2_ref.shape[0] - 1          # 2 * hidden  (policy | value)
    A = w2_ref.shape[1] - 1           # action_dim (last column is value head)

    x = state_ref[...]                # [TB, S]   bf16 MXU input
    w1 = w1_ref[...]                  # [S+1, 2H] bf16 (last row = bias)
    w2 = w2_ref[...]                  # [2H+1, A+1] bf16 block-diag (last row = bias)

    # ---- fused first layer: h = tanh(x @ [Wp1|Wv1] + [bp1|bv1]) ----------
    h = jnp.tanh(
        jnp.dot(x, w1[:S, :], preferred_element_type=jnp.float32)
        + w1[S:S + 1, :].astype(jnp.float32))                    # [TB, 2H] f32

    # ---- fused block-diagonal second layer: [logits | value] -------------
    o2 = (jnp.dot(h.astype(w2.dtype), w2[:H2, :],
                  preferred_element_type=jnp.float32)
          + w2[H2:H2 + 1, :].astype(jnp.float32))                # [TB, A+1]
    logits = o2[:, :A]                                           # [TB, A]
    value = o2[:, A:A + 1]                                       # [TB, 1]

    # ---- log-softmax / entropy (single exp pass, all f32) ----------------
    m = jnp.max(logits, axis=-1, keepdims=True)
    z = logits - m
    ez = jnp.exp(z)
    s = jnp.sum(ez, axis=-1, keepdims=True)
    logp_all = z - jnp.log(s)                                    # [TB, A]
    probs = ez / s
    entropy = -jnp.sum(probs * logp_all, axis=-1, keepdims=True) # [TB, 1]

    # ---- Categorical sampling via Gumbel-max (noise supplied as input) ---
    # action and log_prob are selected with the SAME index (tie-consistent).
    pert = logits + gumbel_ref[...]
    pmax = jnp.max(pert, axis=-1, keepdims=True)
    ids = jax.lax.broadcasted_iota(jnp.int32, pert.shape, 1)
    action = jnp.min(jnp.where(pert == pmax, ids, A),
                     axis=-1, keepdims=True)                     # [TB, 1] i32
    sel = ids == action
    logp_sel = jnp.sum(jnp.where(sel, logp_all, 0.0),
                       axis=-1, keepdims=True)                   # [TB, 1]

    # ---- one concatenated store (no per-column masked stores) ------------
    # TODO(synk): for store-bound giant batches, emit a lane-dense [4, TB]
    # slab (batch on the 128-lane axis) instead; needs an in-kernel transpose.
    out_ref[...] = jnp.concatenate(
        [action.astype(jnp.float32), logp_sel, entropy, value], axis=1)


# ---------------------------------------------------------------------------
# Jitted wrapper: batch grid, weights pinned resident, device-side sampling key
# ---------------------------------------------------------------------------
@partial(jax.jit, static_argnames=("tile_b",))
def ac_forward(state, params, key, *, tile_b=128):
    """AC.forward: (action int32 [B], log_prob [B], entropy [B], value [B])."""
    B, S = state.shape
    w1b1 = params["w1b1"]
    w2b2 = params["w2b2"]
    A = w2b2.shape[1] - 1

    # Batch tile: multiples of 8 sublanes; pad batch so TB divides it.
    TB = min(tile_b, _round_up(B, 8))
    Bp = _round_up(B, TB)

    x = state.astype(w1b1.dtype)          # bf16 MXU input, halves state DMA
    if Bp != B:
        x = jnp.pad(x, ((0, Bp - B), (0, 0)))

    # TODO(synk): when pltpu.prng_* is available on the target runtime, move
    # this Gumbel draw in-kernel to drop the [B, A] noise round trip.
    gumbel = jax.random.gumbel(key, (Bp, A), dtype=jnp.float32)

    out = pl.pallas_call(
        ac_kernel,
        out_shape=jax.ShapeDtypeStruct((Bp, 4), jnp.float32),
        grid=(Bp // TB,),
        in_specs=[
            pl.BlockSpec((TB, S), lambda i: (i, 0)),
            pl.BlockSpec((TB, A), lambda i: (i, 0)),
            # constant block index -> weight slabs stay resident in VMEM
            pl.BlockSpec(w1b1.shape, lambda i: (0, 0)),
            pl.BlockSpec(w2b2.shape, lambda i: (0, 0)),
        ],
        out_specs=pl.BlockSpec((TB, 4), lambda i: (i, 0)),
        compiler_params=pltpu.CompilerParams(
            dimension_semantics=("parallel",)),
    )(x, gumbel, w1b1, w2b2)

    action = out[:B, 0].astype(jnp.int32)
    return action, out[:B, 1], out[:B, 2], out[:B, 3]


# ---------------------------------------------------------------------------
# Deterministic parameter init (orthogonal, matching the PyTorch __init__),
# packed host-side once into the two fused slabs (bf16 for the MXU).
# ---------------------------------------------------------------------------
def make_params(key, state_dim, action_dim, hidden, dtype=jnp.bfloat16):
    def ortho(k, in_f, out_f, gain):
        # orthogonal_ on the torch [out, in] weight, stored transposed [in, out]
        w = jax.nn.initializers.orthogonal(scale=gain)(k, (out_f, in_f),
                                                       jnp.float32)
        return w.T

    ks = jax.random.split(key, 4)
    g = math.sqrt(2.0)
    wp1 = ortho(ks[0], state_dim, hidden, g)          # [S, H]
    bp1 = jnp.zeros((1, hidden), jnp.float32)
    wp2 = ortho(ks[1], hidden, action_dim, 0.01)      # [H, A]
    bp2 = jnp.zeros((1, action_dim), jnp.float32)
    wv1 = ortho(ks[2], state_dim, hidden, g)          # [S, H]
    bv1 = jnp.zeros((1, hidden), jnp.float32)
    wv2 = ortho(ks[3], hidden, 1, 1.0)                # [H, 1]
    bv2 = jnp.zeros((1, 1), jnp.float32)

    # layer 1 slab: [Wp1 | Wv1] with bias as the last row -> [S+1, 2H]
    w1 = jnp.concatenate([wp1, wv1], axis=1)
    b1 = jnp.concatenate([bp1, bv1], axis=1)
    w1b1 = jnp.concatenate([w1, b1], axis=0).astype(dtype)

    # layer 2 slab: block-diagonal [2H, A+1] (policy rows 0:H -> cols 0:A,
    # value rows H:2H -> col A) with bias as the last row -> [2H+1, A+1]
    w2 = jnp.zeros((2 * hidden, action_dim + 1), jnp.float32)
    w2 = w2.at[:hidden, :action_dim].set(wp2)
    w2 = w2.at[hidden:, action_dim:].set(wv2)
    b2 = jnp.concatenate([bp2, bv2], axis=1)
    w2b2 = jnp.concatenate([w2, b2], axis=0).astype(dtype)

    packed = {"w1b1": w1b1, "w2b2": w2b2}
    raw = dict(wp1=wp1, bp1=bp1, wp2=wp2, bp2=bp2,
               wv1=wv1, bv1=bv1, wv2=wv2, bv2=bv2)
    return packed, raw


if __name__ == "__main__":
    state_dim, action_dim, hidden, batch = 32, 8, 64, 256

    root = jax.random.PRNGKey(0)
    k_param, k_state, k_sample = jax.random.split(root, 3)

    params, raw = make_params(k_param, state_dim, action_dim, hidden)
    state = jax.random.normal(k_state, (batch, state_dim), dtype=jnp.float32)

    action, log_prob, entropy, value = ac_forward(state, params, k_sample)
    jax.block_until_ready((action, log_prob, entropy, value))

    # ---- sanity checks vs. a pure-JAX f32 reference (unpacked two heads) ----
    ph = jnp.tanh(state @ raw["wp1"] + raw["bp1"])
    logits_ref = ph @ raw["wp2"] + raw["bp2"]
    vh = jnp.tanh(state @ raw["wv1"] + raw["bv1"])
    value_ref = (vh @ raw["wv2"] + raw["bv2"])[:, 0]
    logp_all_ref = jax.nn.log_softmax(logits_ref, axis=-1)
    entropy_ref = -jnp.sum(jnp.exp(logp_all_ref) * logp_all_ref, axis=-1)
    logp_ref = jnp.take_along_axis(logp_all_ref, action[:, None], axis=-1)[:, 0]

    assert action.shape == (batch,) and action.dtype == jnp.int32
    assert log_prob.shape == (batch,) and entropy.shape == (batch,)
    assert value.shape == (batch,)
    assert bool(jnp.all(action >= 0)) and bool(jnp.all(action < action_dim))
    # bf16 MXU inputs -> slightly looser tolerances than pure-f32
    np.testing.assert_allclose(np.asarray(value), np.asarray(value_ref),
                               rtol=2e-2, atol=2e-2)
    np.testing.assert_allclose(np.asarray(log_prob), np.asarray(logp_ref),
                               rtol=2e-2, atol=2e-2)
    np.testing.assert_allclose(np.asarray(entropy), np.asarray(entropy_ref),
                               rtol=2e-2, atol=2e-2)

    # exercise the small / non-multiple-of-8 batch (padded) path too
    a2, lp2, en2, v2 = ac_forward(state[:20], params, k_sample)
    jax.block_until_ready((a2, lp2, en2, v2))
    assert a2.shape == (20,) and v2.shape == (20,)
    assert bool(jnp.all(a2 >= 0)) and bool(jnp.all(a2 < action_dim))

    print("KERNEL_OK")
</pallas_src>

<mosaic_0001>
module attributes {stable_mosaic.version = 11 : i64} {
  func.func @ac_kernel(%arg0: i32, %arg1: memref<128x32xbf16, #tpu.memory_space<vmem>>, %arg2: memref<128x8xf32, #tpu.memory_space<vmem>>, %arg3: memref<33x128xbf16, #tpu.memory_space<vmem>>, %arg4: memref<129x9xbf16, #tpu.memory_space<vmem>>, %arg5: memref<128x4xf32, #tpu.memory_space<vmem>>) attributes {dimension_semantics = [#tpu.dimension_semantics<parallel>], iteration_bounds = array<i64: 2>, scalar_prefetch = 0 : i64, scratch_operands = 0 : i64, tpu.core_type = #tpu.core_type<tc>, window_params = [{transform_indices = @transform_0, window_bounds = array<i64: 128, 32>}, {transform_indices = @transform_1, window_bounds = array<i64: 128, 8>}, {pipeline_mode = #tpu.pipeline_mode<synchronous>, transform_indices = @transform_2, window_bounds = array<i64: 33, 128>}, {pipeline_mode = #tpu.pipeline_mode<synchronous>, transform_indices = @transform_3, window_bounds = array<i64: 129, 9>}, {transform_indices = @transform_4, window_bounds = array<i64: 128, 4>}]} {
    %c0 = arith.constant 0 : index
    %c0_0 = arith.constant 0 : index
    %0 = vector.load %arg1[%c0, %c0_0] : memref<128x32xbf16, #tpu.memory_space<vmem>>, vector<128x32xbf16>
    %c0_1 = arith.constant 0 : index
    %c0_2 = arith.constant 0 : index
    %1 = vector.load %arg3[%c0_1, %c0_2] : memref<33x128xbf16, #tpu.memory_space<vmem>>, vector<33x128xbf16>
    %c0_3 = arith.constant 0 : index
    %c0_4 = arith.constant 0 : index
    %2 = vector.load %arg4[%c0_3, %c0_4] : memref<129x9xbf16, #tpu.memory_space<vmem>>, vector<129x9xbf16>
    %3 = vector.extract_strided_slice %1 {offsets = [0, 0], sizes = [32, 128], strides = [1, 1]} : vector<33x128xbf16> to vector<32x128xbf16>
    %cst = arith.constant dense<0.000000e+00> : vector<128x128xf32>
    %4 = tpu.matmul %0, %3, %cst {dimension_numbers = #tpu.dot_dimension_numbers<[1], [0], [0], [1], [0, 0, 1, 1], [], []>} : vector<128x32xbf16>, vector<32x128xbf16>, vector<128x128xf32> -> vector<128x128xf32>
    %5 = vector.extract_strided_slice %1 {offsets = [32, 0], sizes = [1, 128], strides = [1, 1]} : vector<33x128xbf16> to vector<1x128xbf16>
    %6 = arith.extf %5 : vector<1x128xbf16> to vector<1x128xf32>
    %7 = vector.broadcast %6 : vector<1x128xf32> to vector<128x128xf32>
    %8 = arith.addf %4, %7 : vector<128x128xf32>
    %9 = math.tanh %8 : vector<128x128xf32>
    %10 = arith.truncf %9 : vector<128x128xf32> to vector<128x128xbf16>
    %11 = vector.extract_strided_slice %2 {offsets = [0, 0], sizes = [128, 9], strides = [1, 1]} : vector<129x9xbf16> to vector<128x9xbf16>
    %cst_5 = arith.constant dense<0.000000e+00> : vector<128x9xf32>
    %12 = tpu.matmul %10, %11, %cst_5 {dimension_numbers = #tpu.dot_dimension_numbers<[1], [0], [0], [1], [0, 0, 1, 1], [], []>} : vector<128x128xbf16>, vector<128x9xbf16>, vector<128x9xf32> -> vector<128x9xf32>
    %13 = vector.extract_strided_slice %2 {offsets = [128, 0], sizes = [1, 9], strides = [1, 1]} : vector<129x9xbf16> to vector<1x9xbf16>
    %14 = arith.extf %13 : vector<1x9xbf16> to vector<1x9xf32>
    %15 = vector.broadcast %14 : vector<1x9xf32> to vector<128x9xf32>
    %16 = arith.addf %12, %15 : vector<128x9xf32>
    %17 = vector.extract_strided_slice %16 {offsets = [0, 0], sizes = [128, 8], strides = [1, 1]} : vector<128x9xf32> to vector<128x8xf32>
    %18 = vector.extract_strided_slice %16 {offsets = [0, 8], sizes = [128, 1], strides = [1, 1]} : vector<128x9xf32> to vector<128x1xf32>
    %cst_6 = arith.constant dense<0xFF800000> : vector<128xf32>
    %19 = vector.multi_reduction <maximumf>, %17, %cst_6 [1] : vector<128x8xf32> to vector<128xf32>
    %20 = vector.shape_cast %19 : vector<128xf32> to vector<128x1xf32>
    %21 = vector.broadcast %20 : vector<128x1xf32> to vector<128x8xf32>
    %22 = arith.subf %17, %21 : vector<128x8xf32>
    %23 = math.exp %22 : vector<128x8xf32>
    %cst_7 = arith.constant dense<0.000000e+00> : vector<128xf32>
    %24 = vector.multi_reduction <add>, %23, %cst_7 [1] : vector<128x8xf32> to vector<128xf32>
    %25 = vector.shape_cast %24 : vector<128xf32> to vector<128x1xf32>
    %26 = math.log %25 : vector<128x1xf32>
    %27 = vector.broadcast %26 : vector<128x1xf32> to vector<128x8xf32>
    %28 = arith.subf %22, %27 : vector<128x8xf32>
    %29 = vector.broadcast %25 : vector<128x1xf32> to vector<128x8xf32>
    %30 = arith.divf %23, %29 : vector<128x8xf32>
    %31 = arith.mulf %30, %28 : vector<128x8xf32>
    %cst_8 = arith.constant dense<0.000000e+00> : vector<128xf32>
    %32 = vector.multi_reduction <add>, %31, %cst_8 [1] : vector<128x8xf32> to vector<128xf32>
    %33 = vector.shape_cast %32 : vector<128xf32> to vector<128x1xf32>
    %cst_9 = arith.constant 0.000000e+00 : f32
    %34 = vector.broadcast %cst_9 : f32 to vector<128x1xf32>
    %35 = arith.subf %34, %33 : vector<128x1xf32>
    %c0_10 = arith.constant 0 : index
    %c0_11 = arith.constant 0 : index
    %36 = vector.load %arg2[%c0_10, %c0_11] : memref<128x8xf32, #tpu.memory_space<vmem>>, vector<128x8xf32>
    %37 = arith.addf %17, %36 : vector<128x8xf32>
    %cst_12 = arith.constant dense<0xFF800000> : vector<128xf32>
    %38 = vector.multi_reduction <maximumf>, %37, %cst_12 [1] : vector<128x8xf32> to vector<128xf32>
    %39 = vector.shape_cast %38 : vector<128xf32> to vector<128x1xf32>
    %40 = tpu.iota {dimensions = array<i32: 1>} : vector<128x8xi32>
    %41 = vector.broadcast %39 : vector<128x1xf32> to vector<128x8xf32>
    %42 = arith.cmpf oeq, %37, %41 : vector<128x8xf32>
    %c8_i32 = arith.constant 8 : i32
    %43 = vector.broadcast %c8_i32 : i32 to vector<128x8xi32>
    %44 = arith.select %42, %40, %43 : vector<128x8xi1>, vector<128x8xi32>
    %cst_13 = arith.constant dense<2147483647> : vector<128xi32>
    %45 = vector.multi_reduction <minsi>, %44, %cst_13 [1] : vector<128x8xi32> to vector<128xi32>
    %46 = vector.shape_cast %45 : vector<128xi32> to vector<128x1xi32>
    %47 = vector.broadcast %46 : vector<128x1xi32> to vector<128x8xi32>
    %48 = arith.cmpi eq, %40, %47 : vector<128x8xi32>
    %cst_14 = arith.constant 0.000000e+00 : f32
    %49 = vector.broadcast %cst_14 : f32 to vector<128x8xf32>
    %50 = arith.select %48, %28, %49 : vector<128x8xi1>, vector<128x8xf32>
    %cst_15 = arith.constant dense<0.000000e+00> : vector<128xf32>
    %51 = vector.multi_reduction <add>, %50, %cst_15 [1] : vector<128x8xf32> to vector<128xf32>
    %52 = vector.shape_cast %51 : vector<128xf32> to vector<128x1xf32>
    %53 = arith.sitofp %46 : vector<128x1xi32> to vector<128x1xf32>
    %54 = tpu.concatenate %53, %52, %35, %18 in 1 : vector<128x1xf32>, vector<128x1xf32>, vector<128x1xf32>, vector<128x1xf32> -> vector<128x4xf32>
    %c0_16 = arith.constant 0 : index
    %c0_17 = arith.constant 0 : index
    %55 = vector.load %arg5[%c0_16, %c0_17] : memref<128x4xf32, #tpu.memory_space<vmem>>, vector<128x4xf32>
    tpu.vector_store %arg5[%c0_16, %c0_17], %54 {strides = array<i32>} : memref<128x4xf32, #tpu.memory_space<vmem>>, vector<128x4xf32>,
    return
  }
  func.func @transform_0(%arg0: i32) -> (i32, i32) {
    %c0_i32 = arith.constant 0 : i32
    %c0_i32_0 = arith.constant 0 : i32
    return %arg0, %c0_i32 : i32, i32
  }
  func.func @transform_1(%arg0: i32) -> (i32, i32) {
    %c0_i32 = arith.constant 0 : i32
    %c0_i32_0 = arith.constant 0 : i32
    return %arg0, %c0_i32 : i32, i32
  }
  func.func @transform_2(%arg0: i32) -> (i32, i32) {
    %c0_i32 = arith.constant 0 : i32
    %c0_i32_0 = arith.constant 0 : i32
    %c0_i32_1 = arith.constant 0 : i32
    return %c0_i32, %c0_i32_0 : i32, i32
  }
  func.func @transform_3(%arg0: i32) -> (i32, i32) {
    %c0_i32 = arith.constant 0 : i32
    %c0_i32_0 = arith.constant 0 : i32
    %c0_i32_1 = arith.constant 0 : i32
    return %c0_i32, %c0_i32_0 : i32, i32
  }
  func.func @transform_4(%arg0: i32) -> (i32, i32) {
    %c0_i32 = arith.constant 0 : i32
    %c0_i32_0 = arith.constant 0 : i32
    return %arg0, %c0_i32 : i32, i32
  }
}

</mosaic_0001>

<llo_original>
// kernel: ac_forward.1
$region0: #{ac_forward.1}
  #allocation0 [shape = 'u32[]', space=smem, size = 0x4, offset = 0x4, fixed_abs, tag = 'smem constant byte address 0x4 - core index']
  #allocation1 [shape = 'u32[144,128]{1,0:T(1,128)}', space=vmem, size = 0x12000, scoped, tag = 'internal scratch']
  %s0 = inlined_call_operand.vmem [shape: bf16[256,32], index: 0, kind: input, shape index: {}]
  %s1 = inlined_call_operand.vmem [shape: f32[256,8], index: 1, kind: input, shape index: {}]
  %s2 = inlined_call_operand.vmem [shape: bf16[33,128], index: 2, kind: input, shape index: {}]
  %s3 = inlined_call_operand.vmem [shape: bf16[129,9], index: 3, kind: input, shape index: {}]
  %s4 = inlined_call_operand.vmem [shape: f32[256,4], index: 4, kind: output, shape index: {}]
  %s5 = sld [smem:[#allocation0]]
  $region49: #{ac_forward.1} parent=0
    _
  %s7 = ssub.s32 1, %s5
  %s8 = scalar_select 0, %s7, %s5
  loop: start=0, step=1, limit=4
  $region2: #{ac_forward.1} parent=0 // loop_pre_header
    _
  $region3: #{ac_forward.1} parent=0 // loop_header
    %s10 = sphi 0, %s14
    %p11 = scmp.ge.s32.totalorder %s10, 4
    %s20 = sphi 0, %s22
    %s23 = sphi 0, %s20
    %s24 = sphi 0, %s23
    %s40 = sphi 0, %s24
    %s46 = sphi 0, %s48
    %s49 = sphi 0, %s46
    %s50 = sphi 0, %s49
    %s66 = sphi 0, %s50
    %s70 = sphi 0, %s70
    %s72 = sphi 0, %s70
    %s73 = sphi 0, %s72
    %s87 = sphi 0, %s73
    %s91 = sphi 0, %s91
    %s93 = sphi 0, %s91
    %s94 = sphi 0, %s93
    %s108 = sphi 0, %s94
    %s114 = sphi 0, %s116
    %s117 = sphi 0, %s114
    %s118 = sphi 0, %s117
    %s134 = sphi 0, %s118
  $region4: #{ac_forward.1} parent=0 // loop_header_branch
    %13 = sbr.rel (%p11) target = $region8
  $region5: #{ac_forward.1} parent=0 // loop_body
    %s15 = ssub.s32 %s10, 1
    %s16 = ssub.s32 %s10, 2
    %s17 = sadd.s32 %s10, 1
    %s18 = ssub.s32 %s10, %s17
    %p19 = scmp.eq.s32.totalorder %s18, 0
    %s21 = sadd.s32 %s20, 1
    %s22 = scalar_select %p19, %s20, %s21
    %p25 = pneg %p19
    %p26 = scmp.eq.s32.totalorder %s10, 1
    %p27 = por %p25, %p26
    %p28 = scmp.ne.s32.totalorder %s20, %s23
    %p29 = scmp.eq.s32.totalorder %s10, 0
    %p30 = por %p28, %p29
    %p31 = scmp.ne.s32.totalorder %s20, %s23
    %p32 = scmp.eq.s32.totalorder %s15, 1
    %p33 = por %p31, %p32
    %p34 = scmp.ne.s32.totalorder %s23, %s24
    %p35 = scmp.eq.s32.totalorder %s15, 0
    %p36 = por %p34, %p35
    %p37 = scmp.ne.s32.totalorder %s23, %s24
    %p38 = scmp.eq.s32.totalorder %s16, 1
    %p39 = por %p37, %p38
    %p41 = scmp.ne.s32.totalorder %s24, %s40
    %p42 = scmp.eq.s32.totalorder %s16, 0
    %p43 = por %p41, %p42
    %s44 = ssub.s32 %s10, %s17
    %p45 = scmp.eq.s32.totalorder %s44, 0
    %s47 = sadd.s32 %s46, 1
    %s48 = scalar_select %p45, %s46, %s47
    %p51 = pneg %p45
    %p52 = scmp.eq.s32.totalorder %s10, 1
    %p53 = por %p51, %p52
    %p54 = scmp.ne.s32.totalorder %s46, %s49
    %p55 = scmp.eq.s32.totalorder %s10, 0
    %p56 = por %p54, %p55
    %p57 = scmp.ne.s32.totalorder %s46, %s49
    %p58 = scmp.eq.s32.totalorder %s15, 1
    %p59 = por %p57, %p58
    %p60 = scmp.ne.s32.totalorder %s49, %s50
    %p61 = scmp.eq.s32.totalorder %s15, 0
    %p62 = por %p60, %p61
    %p63 = scmp.ne.s32.totalorder %s49, %s50
    %p64 = scmp.eq.s32.totalorder %s16, 1
    %p65 = por %p63, %p64
    %p67 = scmp.ne.s32.totalorder %s50, %s66
    %p68 = scmp.eq.s32.totalorder %s16, 0
    %p69 = por %p67, %p68
    %s71 = sadd.s32 %s70, 1
    %p74 = scmp.eq.s32.totalorder %s10, 1
    %p75 = scmp.ne.s32.totalorder %s70, %s72
    %p76 = scmp.eq.s32.totalorder %s10, 0
    %p77 = por %p75, %p76
    %p78 = scmp.ne.s32.totalorder %s70, %s72
    %p79 = scmp.eq.s32.totalorder %s15, 1
    %p80 = por %p78, %p79
    %p81 = scmp.ne.s32.totalorder %s72, %s73
    %p82 = scmp.eq.s32.totalorder %s15, 0
    %p83 = por %p81, %p82
    %p84 = scmp.ne.s32.totalorder %s72, %s73
    %p85 = scmp.eq.s32.totalorder %s16, 1
    %p86 = por %p84, %p85
    %p88 = scmp.ne.s32.totalorder %s73, %s87
    %p89 = scmp.eq.s32.totalorder %s16, 0
    %p90 = por %p88, %p89
    %s92 = sadd.s32 %s91, 1
    %p95 = scmp.eq.s32.totalorder %s10, 1
    %p96 = scmp.ne.s32.totalorder %s91, %s93
    %p97 = scmp.eq.s32.totalorder %s10, 0
    %p98 = por %p96, %p97
    %p99 = scmp.ne.s32.totalorder %s91, %s93
    %p100 = scmp.eq.s32.totalorder %s15, 1
    %p101 = por %p99, %p100
    %p102 = scmp.ne.s32.totalorder %s93, %s94
    %p103 = scmp.eq.s32.totalorder %s15, 0
    %p104 = por %p102, %p103
    %p105 = scmp.ne.s32.totalorder %s93, %s94
    %p106 = scmp.eq.s32.totalorder %s16, 1
    %p107 = por %p105, %p106
    %p109 = scmp.ne.s32.totalorder %s94, %s108
    %p110 = scmp.eq.s32.totalorder %s16, 0
    %p111 = por %p109, %p110
    %s112 = ssub.s32 %s10, %s17
    %p113 = scmp.eq.s32.totalorder %s112, 0
    %s115 = sadd.s32 %s114, 1
    %s116 = scalar_select %p113, %s114, %s115
    %p119 = pneg %p113
    %p120 = scmp.eq.s32.totalorder %s10, 1
    %p121 = por %p119, %p120
    %p122 = scmp.ne.s32.totalorder %s114, %s117
    %p123 = scmp.eq.s32.totalorder %s10, 0
    %p124 = por %p122, %p123
    %p125 = scmp.ne.s32.totalorder %s114, %s117
    %p126 = scmp.eq.s32.totalorder %s15, 1
    %p127 = por %p125, %p126
    %p128 = scmp.ne.s32.totalorder %s117, %s118
    %p129 = scmp.eq.s32.totalorder %s15, 0
    %p130 = por %p128, %p129
    %p131 = scmp.ne.s32.totalorder %s117, %s118
    %p132 = scmp.eq.s32.totalorder %s16, 1
    %p133 = por %p131, %p132
    %p135 = scmp.ne.s32.totalorder %s118, %s134
    %p136 = scmp.eq.s32.totalorder %s16, 0
    %p137 = por %p135, %p136
    %p138 = scmp.le.s32.totalorder 1, %s10
    %p139 = scmp.lt.s32.totalorder %s10, 3
    %p140 = pnand %p138, %p139
    %p141 = pneg %p140
    // Predicated region
    $region9: #{ac_forward.1} parent=5 // pred_check
      _
    $region10: #{ac_forward.1} parent=5 // pred_check_branch
      %143 = sbr.rel (%p140) target = $region12
    $region11: #{ac_forward.1} parent=5 // pred_region
      %s144 = ssub.s32 %s10, 1
      // Predicated region
      $region13: #{ac_forward.1} parent=11 // pred_check
        %p145 = pneg %p83
      $region14: #{ac_forward.1} parent=11 // pred_check_branch
        %147 = sbr.rel (%p145) target = $region16
      $region15: #{ac_forward.1} parent=11 // pred_region
        _
      $region16: #{ac_forward.1} parent=11 // pred_fallthru
        _
      // Predicated region
      $region17: #{ac_forward.1} parent=11 // pred_check
        %p148 = pneg %p104
      $region18: #{ac_forward.1} parent=11 // pred_check_branch
        %150 = sbr.rel (%p148) target = $region20
      $region19: #{ac_forward.1} parent=11 // pred_region
        _
      $region20: #{ac_forward.1} parent=11 // pred_fallthru
        _
    $region12: #{ac_forward.1} parent=5 // pred_fallthru
      _
    %p151 = scmp.lt.s32.totalorder %s10, 2
    // Predicated region
    $region21: #{ac_forward.1} parent=5 // pred_check
      %p152 = pneg %p151
    $region22: #{ac_forward.1} parent=5 // pred_check_branch
      %154 = sbr.rel (%p152) target = $region24
    $region23: #{ac_forward.1} parent=5 // pred_region
      // Predicated region
      $region25: #{ac_forward.1} parent=23 // pred_check
        %p155 = pneg %p30
      $region26: #{ac_forward.1} parent=23 // pred_check_branch
        %157 = sbr.rel (%p155) target = $region28
      $region27: #{ac_forward.1} parent=23 // pred_region
        %s158 = smul.u32 16, %s10
        %p159 = scmp.lt.s32.totalorder %s158, 31
        %s160 = scalar_select %p159, %s158, 31
        %s161 = smul.addr %s160, 4
        %s162 = scalar_lea.vmem %s0, %s161
        %s163 = smul.u32 16, %s10
      $region28: #{ac_forward.1} parent=23 // pred_fallthru
        _
      // Predicated region
      $region29: #{ac_forward.1} parent=23 // pred_check
        %p164 = pneg %p56
      $region30: #{ac_forward.1} parent=23 // pred_check_branch
        %166 = sbr.rel (%p164) target = $region32
      $region31: #{ac_forward.1} parent=23 // pred_region
        %s167 = smul.u32 16, %s10
        %p168 = scmp.lt.s32.totalorder %s167, 31
        %s169 = scalar_select %p168, %s167, 31
        %s170 = smul.addr %s169, 8
        %s171 = scalar_lea.vmem %s1, %s170
        %s172 = smul.u32 16, %s10
      $region32: #{ac_forward.1} parent=23 // pred_fallthru
        _
    $region24: #{ac_forward.1} parent=5 // pred_fallthru
      _
    %p173 = scmp.le.s32.totalorder 1, %s10
    %p174 = scmp.lt.s32.totalorder %s10, 3
    %p175 = pnand %p173, %p174
    %p176 = pneg %p175
    // Predicated region
    $region33: #{ac_forward.1} parent=5 // pred_check
      _
    $region34: #{ac_forward.1} parent=5 // pred_check_branch
      %178 = sbr.rel (%p175) target = $region36
    $region35: #{ac_forward.1} parent=5 // pred_region
      %s179 = ssub.s32 %s10, 1
      %s180 = smul.u32 16, %s15
      %p181 = scmp.lt.s32.totalorder %s180, 31
      %s182 = scalar_select %p181, %s180, 31
      %s183 = smul.addr %s182, 4
      %s184 = scalar_lea.vmem %s0, %s183
      %p185 = pneg %p36
      %p186 = pneg %p33
      %s187 = smul.u32 16, %s15
      %p188 = scmp.lt.s32.totalorder %s187, 31
      %s189 = scalar_select %p188, %s187, 31
      %s190 = smul.addr %s189, 8
      %s191 = scalar_lea.vmem %s1, %s190
      %p192 = pneg %p62
      %p193 = pneg %p59
      %p194 = pneg %p83
      %p195 = pneg %p80
      %p196 = pneg %p104
      %p197 = pneg %p101
      %p198 = pneg %p130
      %p199 = pneg %p127
      %s200 = smul.u32 16, %s15
      %p201 = scmp.lt.s32.totalorder %s200, 31
      %s202 = scalar_select %p201, %s200, 31
      %s203 = smul.addr %s202, 8
      %s204 = scalar_lea.vmem %s4, %s203
      %s205 = smul.u32 16, %s15
      %p206 = scmp.lt.s32.totalorder %s205, 31
      %s207 = scalar_select %p206, %s205, 31
      %s208 = smul.addr %s207, 4
      %s209 = scalar_lea.vmem %s0, %s208
      %s210 = smul.u32 16, %s15
      %s211 = smul.u32 16, %s15
      %p212 = scmp.lt.s32.totalorder %s211, 31
      %s213 = scalar_select %p212, %s211, 31
      %s214 = smul.addr %s213, 8
      %s215 = scalar_lea.vmem %s1, %s214
      %s216 = smul.u32 16, %s15
      %s217 = smul.u32 16, %s15
      %p218 = scmp.lt.s32.totalorder %s217, 31
      %s219 = scalar_select %p218, %s217, 31
      %s220 = smul.addr %s219, 8
      %s221 = scalar_lea.vmem %s4, %s220
      %s222 = smul.u32 16, %s15
      %v224 = vld [vmem:[%s209] sm:$0xf]
      %v225 = vld [vmem:[%s209 + $0x4] sm:$0xf]
      %v226 = vld [vmem:[%s209 + $0x8] sm:$0xf]
      %v227 = vld [vmem:[%s209 + $0xc] sm:$0xf]
      %v228 = vld [vmem:[%s209 + $0x10] sm:$0xf]
      %v229 = vld [vmem:[%s209 + $0x14] sm:$0xf]
      %v230 = vld [vmem:[%s209 + $0x18] sm:$0xf]
      %v231 = vld [vmem:[%s209 + $0x1c] sm:$0xf]
      %v232 = vld [vmem:[%s209 + $0x20] sm:$0xf]
      %v233 = vld [vmem:[%s209 + $0x24] sm:$0xf]
      %v234 = vld [vmem:[%s209 + $0x28] sm:$0xf]
      %v235 = vld [vmem:[%s209 + $0x2c] sm:$0xf]
      %v236 = vld [vmem:[%s209 + $0x30] sm:$0xf]
      %v237 = vld [vmem:[%s209 + $0x34] sm:$0xf]
      %v238 = vld [vmem:[%s209 + $0x38] sm:$0xf]
      %v239 = vld [vmem:[%s209 + $0x3c] sm:$0xf]
      %v240 = vld [vmem:[%s2] sm:$0xf]
      %v241 = vld [vmem:[%s2 + $0x4] sm:$0xf]
      %v242 = vld [vmem:[%s2 + $0x8] sm:$0xf]
      %v243 = vld [vmem:[%s2 + $0xc] sm:$0xf]
      %v244 = vld [vmem:[%s2 + $0x10] sm:$0x1]
      %v245 = vld [vmem:[%s3] sm:$0xf]
      %v246 = vld [vmem:[%s3 + $0x4] sm:$0xf]
      %v247 = vld [vmem:[%s3 + $0x8] sm:$0xf]
      %v248 = vld [vmem:[%s3 + $0xc] sm:$0xf]
      %v249 = vld [vmem:[%s3 + $0x10] sm:$0xf]
      %v250 = vld [vmem:[%s3 + $0x14] sm:$0xf]
      %v251 = vld [vmem:[%s3 + $0x18] sm:$0xf]
      %v252 = vld [vmem:[%s3 + $0x1c] sm:$0xf]
      %v253 = vld [vmem:[%s3 + $0x20] sm:$0xf]
      %v254 = vld [vmem:[%s3 + $0x24] sm:$0xf]
      %v255 = vld [vmem:[%s3 + $0x28] sm:$0xf]
      %v256 = vld [vmem:[%s3 + $0x2c] sm:$0xf]
      %v257 = vld [vmem:[%s3 + $0x30] sm:$0xf]
      %v258 = vld [vmem:[%s3 + $0x34] sm:$0xf]
      %v259 = vld [vmem:[%s3 + $0x38] sm:$0xf]
      %v260 = vld [vmem:[%s3 + $0x3c] sm:$0xf]
      %v261 = vld [vmem:[%s3 + $0x40] sm:$0x1]
      %v262 = vunpack.c.l.bf16 %v244
      %v263 = vlaneseq
      %v264 = vshrl.u32 %v263, 7
      %v265 = vsub.s32 0, %v264
      %v266 = vrot.slane %v262, %v265
      %v283 = vunpack.c.l.b16 %v224
      %v284 = vunpack.c.l.b16 %v225
      %v285 = vunpack.c.l.b16 %v226
      %v286 = vunpack.c.l.b16 %v227
      %v287 = vunpack.c.l.b16 %v228
      %v288 = vunpack.c.l.b16 %v229
      %v289 = vunpack.c.l.b16 %v230
      %v290 = vunpack.c.l.b16 %v231
      %v291 = vunpack.c.l.b16 %v232
      %v292 = vunpack.c.l.b16 %v233
      %v293 = vunpack.c.l.b16 %v234
      %v294 = vunpack.c.l.b16 %v235
      %v295 = vunpack.c.l.b16 %v236
      %v296 = vunpack.c.l.b16 %v237
      %v297 = vunpack.c.l.b16 %v238
      %v298 = vunpack.c.l.b16 %v239
      %v299 = vpack.c.b16 %v284, %v283
      %v300 = vpack.c.b16 %v286, %v285
      %v301 = vpack.c.b16 %v288, %v287
      %v302 = vpack.c.b16 %v290, %v289
      %v303 = vpack.c.b16 %v292, %v291
      %v304 = vpack.c.b16 %v294, %v293
      %v305 = vpack.c.b16 %v296, %v295
      %v306 = vpack.c.b16 %v298, %v297
      %v311 = vunpack.c.l.b16 %v240
      %v312 = vunpack.c.l.b16 %v241
      %v313 = vunpack.c.l.b16 %v242
      %v314 = vunpack.c.l.b16 %v243
      %v315 = vpack.c.b16 %v312, %v311
      %v316 = vpack.c.b16 %v314, %v313
      %vm319 = vcmask 261120
      %v321 = vsel %vm319, %v299, 0
      %v324 = vsel %vm319, %v300, 0
      %v327 = vsel %vm319, %v301, 0
      %v330 = vsel %vm319, %v302, 0
      %v333 = vsel %vm319, %v303, 0
      %v336 = vsel %vm319, %v304, 0
      %v339 = vsel %vm319, %v305, 0
      %v342 = vsel %vm319, %v306, 0
      %344 = vmatprep.subr.bf16.mxu0 0
      %345 = vmatpush1.bf16.msra.mxu0 0
      %346 = vmatprep.subr.bf16.mxu0 0
      %347 = vmatpush1.bf16.msra.mxu0 0
      %348 = vmatprep.subr.bf16.mxu0 0
      %349 = vmatpush1.bf16.msra.mxu0 0
      %350 = vmatprep.subr.bf16.mxu0 0
      %351 = vmatpush1.bf16.msra.mxu0 0
      %352 = vmatprep.subr.bf16.mxu0 0
      %353 = vmatpush1.bf16.msra.mxu0 0
      %354 = vmatprep.subr.bf16.mxu0 0
      %355 = vmatpush1.bf16.msra.mxu0 0
      %356 = vmatprep.subr.bf16.mxu0 0
      %357 = vmatpush1.bf16.msra.mxu0 %v316
      %358 = vmatprep.subr.bf16.mxu0 0
      %359 = vmatpush1.bf16.msra.mxu0 %v315
      %360 = vmatprep.subr.bf16.mxu0 0
      %361 = vmatpush2.bf16.msra.mxu0 0
      %362 = vmatprep.subr.bf16.mxu0 0
      %363 = vmatpush2.bf16.msra.mxu0 0
      %364 = vmatprep.subr.bf16.mxu0 0
      %365 = vmatpush2.bf16.msra.mxu0 0
      %366 = vmatprep.subr.bf16.mxu0 0
      %367 = vmatpush2.bf16.msra.mxu0 0
      %368 = vmatprep.subr.bf16.mxu0 0
      %369 = vmatpush2.bf16.msra.mxu0 0
      %370 = vmatprep.subr.bf16.mxu0 0
      %371 = vmatpush2.bf16.msra.mxu0 0
      %372 = vmatprep.subr.bf16.mxu0 0
      %373 = vmatpush2.bf16.msra.mxu0 0
      %374 = vmatprep.subr.bf16.mxu0 0
      %375 = vmatpush2.bf16.msra.mxu0 0
      %376 = vmatprep.mubr.bf16.mxu0 0
      %377 = vmatmul.mubr.bf16.gmra.mxu0 %v321
      %v378 = vpop.f32.mrf.mxu0
      %v379 = vadd.f32 %v266, %v378
      %v380 = vpop.f32.mrf.mxu0
      %v381 = vpop.f32.mrf.mxu0
      %v382 = vadd.f32 %v266, %v381
      %v383 = vpop.f32.mrf.mxu0
      %384 = vmatprep.mubr.bf16.mxu0 0
      %385 = vmatmul.mubr.bf16.gmra.mxu0 %v324
      %v386 = vpop.f32.mrf.mxu0
      %v387 = vadd.f32 %v266, %v386
      %v388 = vpop.f32.mrf.mxu0
      %v389 = vpop.f32.mrf.mxu0
      %v390 = vadd.f32 %v266, %v389
      %v391 = vpop.f32.mrf.mxu0
      %392 = vmatprep.mubr.bf16.mxu0 0
      %393 = vmatmul.mubr.bf16.gmra.mxu0 %v327
      %v394 = vpop.f32.mrf.mxu0
      %v395 = vadd.f32 %v266, %v394
      %v396 = vpop.f32.mrf.mxu0
      %v397 = vpop.f32.mrf.mxu0
      %v398 = vadd.f32 %v266, %v397
      %v399 = vpop.f32.mrf.mxu0
      %400 = vmatprep.mubr.bf16.mxu0 0
      %401 = vmatmul.mubr.bf16.gmra.mxu0 %v330
      %v402 = vpop.f32.mrf.mxu0
      %v403 = vadd.f32 %v266, %v402
      %v404 = vpop.f32.mrf.mxu0
      %v405 = vpop.f32.mrf.mxu0
      %v406 = vadd.f32 %v266, %v405
      %v407 = vpop.f32.mrf.mxu0
      %408 = vmatprep.mubr.bf16.mxu0 0
      %409 = vmatmul.mubr.bf16.gmra.mxu0 %v333
      %v410 = vpop.f32.mrf.mxu0
      %v411 = vadd.f32 %v266, %v410
      %v412 = vpop.f32.mrf.mxu0
      %v413 = vpop.f32.mrf.mxu0
      %v414 = vadd.f32 %v266, %v413
      %v415 = vpop.f32.mrf.mxu0
      %416 = vmatprep.mubr.bf16.mxu0 0
      %417 = vmatmul.mubr.bf16.gmra.mxu0 %v336
      %v418 = vpop.f32.mrf.mxu0
      %v419 = vadd.f32 %v266, %v418
      %v420 = vpop.f32.mrf.mxu0
      %v421 = vpop.f32.mrf.mxu0
      %v422 = vadd.f32 %v266, %v421
      %v423 = vpop.f32.mrf.mxu0
      %424 = vmatprep.mubr.bf16.mxu0 0
      %425 = vmatmul.mubr.bf16.gmra.mxu0 %v339
      %v426 = vpop.f32.mrf.mxu0
      %v427 = vadd.f32 %v266, %v426
      %v428 = vpop.f32.mrf.mxu0
      %v429 = vpop.f32.mrf.mxu0
      %v430 = vadd.f32 %v266, %v429
      %v431 = vpop.f32.mrf.mxu0
      %432 = vmatprep.mubr.bf16.mxu0 0
      %433 = vmatmul.mubr.bf16.gmra.mxu0 %v342
      %v434 = vpop.f32.mrf.mxu0
      %v435 = vadd.f32 %v266, %v434
      %v436 = vpop.f32.mrf.mxu0
      %v437 = vpop.f32.mrf.mxu0
      %v438 = vadd.f32 %v266, %v437
      %v439 = vpop.f32.mrf.mxu0
      %440 = vdwg.mxu0
      %v441 = vtanh.pop %v379
      %v442 = vtanh.pop %v382
      %v443 = vtanh.pop %v387
      %v444 = vtanh.pop %v390
      %v445 = vtanh.pop %v395
      %v446 = vtanh.pop %v398
      %v447 = vtanh.pop %v403
      %v448 = vtanh.pop %v406
      %v449 = vtanh.pop %v411
      %v450 = vtanh.pop %v414
      %v451 = vtanh.pop %v419
      %v452 = vtanh.pop %v422
      %v453 = vtanh.pop %v427
      %v454 = vtanh.pop %v430
      %v455 = vtanh.pop %v435
      %v456 = vtanh.pop %v438
      %v457 = vpack.c.bf16 %v442, %v441
      %v458 = vpack.c.bf16 %v444, %v443
      %v459 = vpack.c.bf16 %v446, %v445
      %v460 = vpack.c.bf16 %v448, %v447
      %v461 = vpack.c.bf16 %v450, %v449
      %v462 = vpack.c.bf16 %v452, %v451
      %v463 = vpack.c.bf16 %v454, %v453
      %v464 = vpack.c.bf16 %v456, %v455
      %v465 = vunpack.c.l.bf16 %v261
      %v466 = vlaneseq
      %v467 = vshrl.u32 %v466, 7
      %v468 = vsub.s32 0, %v467
      %v469 = vrot.slane %v465, %v468
      %v486 = vunpack.c.l.b16 %v245
      %v487 = vunpack.c.l.b16 %v246
      %v488 = vunpack.c.l.b16 %v247
      %v489 = vunpack.c.l.b16 %v248
      %v490 = vunpack.c.l.b16 %v249
      %v491 = vunpack.c.l.b16 %v250
      %v492 = vunpack.c.l.b16 %v251
      %v493 = vunpack.c.l.b16 %v252
      %v494 = vunpack.c.l.b16 %v253
      %v495 = vunpack.c.l.b16 %v254
      %v496 = vunpack.c.l.b16 %v255
      %v497 = vunpack.c.l.b16 %v256
      %v498 = vunpack.c.l.b16 %v257
      %v499 = vunpack.c.l.b16 %v258
      %v500 = vunpack.c.l.b16 %v259
      %v501 = vunpack.c.l.b16 %v260
      %v502 = vpack.c.b16 %v487, %v486
      %v503 = vpack.c.b16 %v489, %v488
      %v504 = vpack.c.b16 %v491, %v490
      %v505 = vpack.c.b16 %v493, %v492
      %v506 = vpack.c.b16 %v495, %v494
      %v507 = vpack.c.b16 %v497, %v496
      %v508 = vpack.c.b16 %v499, %v498
      %v509 = vpack.c.b16 %v501, %v500
      %518 = vmatprep.subr.bf16.mxu0 0
      %519 = vmatpush1.bf16.msra.mxu0 %v509
      %520 = vmatprep.subr.bf16.mxu0 0
      %521 = vmatpush1.bf16.msra.mxu0 %v508
      %522 = vmatprep.subr.bf16.mxu0 0
      %523 = vmatpush1.bf16.msra.mxu0 %v507
      %524 = vmatprep.subr.bf16.mxu0 0
      %525 = vmatpush1.bf16.msra.mxu0 %v506
      %526 = vmatprep.subr.bf16.mxu0 0
      %527 = vmatpush1.bf16.msra.mxu0 %v505
      %528 = vmatprep.subr.bf16.mxu0 0
      %529 = vmatpush1.bf16.msra.mxu0 %v504
      %530 = vmatprep.subr.bf16.mxu0 0
      %531 = vmatpush1.bf16.msra.mxu0 %v503
      %532 = vmatprep.subr.bf16.mxu0 0
      %533 = vmatpush1.bf16.msra.mxu0 %v502
      %534 = vmatprep.subr.bf16.mxu0 0
      %535 = vmatpush2.bf16.msra.mxu0 0
      %536 = vmatprep.subr.bf16.mxu0 0
      %537 = vmatpush2.bf16.msra.mxu0 0
      %538 = vmatprep.subr.bf16.mxu0 0
      %539 = vmatpush2.bf16.msra.mxu0 0
      %540 = vmatprep.subr.bf16.mxu0 0
      %541 = vmatpush2.bf16.msra.mxu0 0
      %542 = vmatprep.subr.bf16.mxu0 0
      %543 = vmatpush2.bf16.msra.mxu0 0
      %544 = vmatprep.subr.bf16.mxu0 0
      %545 = vmatpush2.bf16.msra.mxu0 0
      %546 = vmatprep.subr.bf16.mxu0 0
      %547 = vmatpush2.bf16.msra.mxu0 0
      %548 = vmatprep.subr.bf16.mxu0 0
      %549 = vmatpush2.bf16.msra.mxu0 0
      %550 = vmatprep.mubr.bf16.mxu0 0
      %551 = vmatmul.mubr.bf16.gmra.mxu0 %v457
      %v552 = vpop.f32.mrf.mxu0
      %v553 = vadd.f32 %v469, %v552
      %v554 = vpop.f32.mrf.mxu0
      %v555 = vpop.f32.mrf.mxu0
      %v556 = vadd.f32 %v469, %v555
      %v557 = vpop.f32.mrf.mxu0
      %558 = vmatprep.mubr.bf16.mxu0 0
      %559 = vmatmul.mubr.bf16.gmra.mxu0 %v458
      %v560 = vpop.f32.mrf.mxu0
      %v561 = vadd.f32 %v469, %v560
      %v562 = vpop.f32.mrf.mxu0
      %v563 = vpop.f32.mrf.mxu0
      %v564 = vadd.f32 %v469, %v563
      %v565 = vpop.f32.mrf.mxu0
      %566 = vmatprep.mubr.bf16.mxu0 0
      %567 = vmatmul.mubr.bf16.gmra.mxu0 %v459
      %v568 = vpop.f32.mrf.mxu0
      %v569 = vadd.f32 %v469, %v568
      %v570 = vpop.f32.mrf.mxu0
      %v571 = vpop.f32.mrf.mxu0
      %v572 = vadd.f32 %v469, %v571
      %v573 = vpop.f32.mrf.mxu0
      %574 = vmatprep.mubr.bf16.mxu0 0
      %575 = vmatmul.mubr.bf16.gmra.mxu0 %v460
      %v576 = vpop.f32.mrf.mxu0
      %v577 = vadd.f32 %v469, %v576
      %v578 = vpop.f32.mrf.mxu0
      %v579 = vpop.f32.mrf.mxu0
      %v580 = vadd.f32 %v469, %v579
      %v581 = vpop.f32.mrf.mxu0
      %582 = vmatprep.mubr.bf16.mxu0 0
      %583 = vmatmul.mubr.bf16.gmra.mxu0 %v461
      %v584 = vpop.f32.mrf.mxu0
      %v585 = vadd.f32 %v469, %v584
      %v586 = vpop.f32.mrf.mxu0
      %v587 = vpop.f32.mrf.mxu0
      %v588 = vadd.f32 %v469, %v587
      %v589 = vpop.f32.mrf.mxu0
      %590 = vmatprep.mubr.bf16.mxu0 0
      %591 = vmatmul.mubr.bf16.gmra.mxu0 %v462
      %v592 = vpop.f32.mrf.mxu0
      %v593 = vadd.f32 %v469, %v592
      %v594 = vpop.f32.mrf.mxu0
      %v595 = vpop.f32.mrf.mxu0
      %v596 = vadd.f32 %v469, %v595
      %v597 = vpop.f32.mrf.mxu0
      %598 = vmatprep.mubr.bf16.mxu0 0
      %599 = vmatmul.mubr.bf16.gmra.mxu0 %v463
      %v600 = vpop.f32.mrf.mxu0
      %v601 = vadd.f32 %v469, %v600
      %v602 = vpop.f32.mrf.mxu0
      %v603 = vpop.f32.mrf.mxu0
      %v604 = vadd.f32 %v469, %v603
      %v605 = vpop.f32.mrf.mxu0
      %606 = vmatprep.mubr.bf16.mxu0 0
      %607 = vmatmul.mubr.bf16.gmra.mxu0 %v464
      %v608 = vpop.f32.mrf.mxu0
      %v609 = vadd.f32 %v469, %v608
      %v610 = vpop.f32.mrf.mxu0
      %v611 = vpop.f32.mrf.mxu0
      %v612 = vadd.f32 %v469, %v611
      %v613 = vpop.f32.mrf.mxu0
      %614 = vdwg.mxu0
      %vm615 = vcmask 64512
      %v616 = vsel %vm615, %v553, -inf
      %617 = vmax.xlane.f32.xlu0 %v616
      %v618 = vpop.xlane.xlu0 %617
      %v619 = vsel %vm615, %v556, -inf
      %620 = vmax.xlane.f32.xlu0 %v619
      %v621 = vpop.xlane.xlu0 %620
      %v622 = vsel %vm615, %v561, -inf
      %623 = vmax.xlane.f32.xlu0 %v622
      %v624 = vpop.xlane.xlu0 %623
      %v625 = vsel %vm615, %v564, -inf
      %626 = vmax.xlane.f32.xlu0 %v625
      %v627 = vpop.xlane.xlu0 %626
      %v628 = vsel %vm615, %v569, -inf
      %629 = vmax.xlane.f32.xlu0 %v628
      %v630 = vpop.xlane.xlu0 %629
      %v631 = vsel %vm615, %v572, -inf
      %632 = vmax.xlane.f32.xlu0 %v631
      %v633 = vpop.xlane.xlu0 %632
      %v634 = vsel %vm615, %v577, -inf
      %635 = vmax.xlane.f32.xlu0 %v634
      %v636 = vpop.xlane.xlu0 %635
      %v637 = vsel %vm615, %v580, -inf
      %638 = vmax.xlane.f32.xlu0 %v637
      %v639 = vpop.xlane.xlu0 %638
      %v640 = vsel %vm615, %v585, -inf
      %641 = vmax.xlane.f32.xlu0 %v640
      %v642 = vpop.xlane.xlu0 %641
      %v643 = vsel %vm615, %v588, -inf
      %644 = vmax.xlane.f32.xlu0 %v643
      %v645 = vpop.xlane.xlu0 %644
      %v646 = vsel %vm615, %v593, -inf
      %647 = vmax.xlane.f32.xlu0 %v646
      %v648 = vpop.xlane.xlu0 %647
      %v649 = vsel %vm615, %v596, -inf
      %650 = vmax.xlane.f32.xlu0 %v649
      %v651 = vpop.xlane.xlu0 %650
      %v652 = vsel %vm615, %v601, -inf
      %653 = vmax.xlane.f32.xlu0 %v652
      %v654 = vpop.xlane.xlu0 %653
      %v655 = vsel %vm615, %v604, -inf
      %656 = vmax.xlane.f32.xlu0 %v655
      %v657 = vpop.xlane.xlu0 %656
      %v658 = vsel %vm615, %v609, -inf
      %659 = vmax.xlane.f32.xlu0 %v658
      %v660 = vpop.xlane.xlu0 %659
      %v661 = vsel %vm615, %v612, -inf
      %662 = vmax.xlane.f32.xlu0 %v661
      %v663 = vpop.xlane.xlu0 %662
      %v664 = vsub.f32 %v553, %v618
      %v665 = vsub.f32 %v556, %v621
      %v666 = vsub.f32 %v561, %v624
      %v667 = vsub.f32 %v564, %v627
      %v668 = vsub.f32 %v569, %v630
      %v669 = vsub.f32 %v572, %v633
      %v670 = vsub.f32 %v577, %v636
      %v671 = vsub.f32 %v580, %v639
      %v672 = vsub.f32 %v585, %v642
      %v673 = vsub.f32 %v588, %v645
      %v674 = vsub.f32 %v593, %v648
      %v675 = vsub.f32 %v596, %v651
      %v676 = vsub.f32 %v601, %v654
      %v677 = vsub.f32 %v604, %v657
      %v678 = vsub.f32 %v609, %v660
      %v679 = vsub.f32 %v612, %v663
      %v680 = vmul.f32 %v664, 1.442695
      %v681 = vpow.pop %v680
      %v682 = vmul.f32 %v665, 1.442695
      %v683 = vpow.pop %v682
      %v684 = vmul.f32 %v666, 1.442695
      %v685 = vpow.pop %v684
      %v686 = vmul.f32 %v667, 1.442695
      %v687 = vpow.pop %v686
      %v688 = vmul.f32 %v668, 1.442695
      %v689 = vpow.pop %v688
      %v690 = vmul.f32 %v669, 1.442695
      %v691 = vpow.pop %v690
      %v692 = vmul.f32 %v670, 1.442695
      %v693 = vpow.pop %v692
      %v694 = vmul.f32 %v671, 1.442695
      %v695 = vpow.pop %v694
      %v696 = vmul.f32 %v672, 1.442695
      %v697 = vpow.pop %v696
      %v698 = vmul.f32 %v673, 1.442695
      %v699 = vpow.pop %v698
      %v700 = vmul.f32 %v674, 1.442695
      %v701 = vpow.pop %v700
      %v702 = vmul.f32 %v675, 1.442695
      %v703 = vpow.pop %v702
      %v704 = vmul.f32 %v676, 1.442695
      %v705 = vpow.pop %v704
      %v706 = vmul.f32 %v677, 1.442695
      %v707 = vpow.pop %v706
      %v708 = vmul.f32 %v678, 1.442695
      %v709 = vpow.pop %v708
      %v710 = vmul.f32 %v679, 1.442695
      %v711 = vpow.pop %v710
      %v712 = vsel %vm615, %v681, 0.0
      %713 = vadd.xlane.f32.xlu0 %v712
      %v714 = vpop.xlane.xlu0 %713
      %v715 = vsel %vm615, %v683, 0.0
      %716 = vadd.xlane.f32.xlu0 %v715
      %v717 = vpop.xlane.xlu0 %716
      %v718 = vsel %vm615, %v685, 0.0
      %719 = vadd.xlane.f32.xlu0 %v718
      %v720 = vpop.xlane.xlu0 %719
      %v721 = vsel %vm615, %v687, 0.0
      %722 = vadd.xlane.f32.xlu0 %v721
      %v723 = vpop.xlane.xlu0 %722
      %v724 = vsel %vm615, %v689, 0.0
      %725 = vadd.xlane.f32.xlu0 %v724
      %v726 = vpop.xlane.xlu0 %725
      %v727 = vsel %vm615, %v691, 0.0
      %728 = vadd.xlane.f32.xlu0 %v727
      %v729 = vpop.xlane.xlu0 %728
      %v730 = vsel %vm615, %v693, 0.0
      %731 = vadd.xlane.f32.xlu0 %v730
      %v732 = vpop.xlane.xlu0 %731
      %v733 = vsel %vm615, %v695, 0.0
      %734 = vadd.xlane.f32.xlu0 %v733
      %v735 = vpop.xlane.xlu0 %734
      %v736 = vsel %vm615, %v697, 0.0
      %737 = vadd.xlane.f32.xlu0 %v736
      %v738 = vpop.xlane.xlu0 %737
      %v739 = vsel %vm615, %v699, 0.0
      %740 = vadd.xlane.f32.xlu0 %v739
      %v741 = vpop.xlane.xlu0 %740
      %v742 = vsel %vm615, %v701, 0.0
      %743 = vadd.xlane.f32.xlu0 %v742
      %v744 = vpop.xlane.xlu0 %743
      %v745 = vsel %vm615, %v703, 0.0
      %746 = vadd.xlane.f32.xlu0 %v745
      %v747 = vpop.xlane.xlu0 %746
      %v748 = vsel %vm615, %v705, 0.0
      %749 = vadd.xlane.f32.xlu0 %v748
      %v750 = vpop.xlane.xlu0 %749
      %v751 = vsel %vm615, %v707, 0.0
      %752 = vadd.xlane.f32.xlu0 %v751
      %v753 = vpop.xlane.xlu0 %752
      %v754 = vsel %vm615, %v709, 0.0
      %755 = vadd.xlane.f32.xlu0 %v754
      %v756 = vpop.xlane.xlu0 %755
      %v757 = vsel %vm615, %v711, 0.0
      %758 = vadd.xlane.f32.xlu0 %v757
      %v759 = vpop.xlane.xlu0 %758
      %v760 = vlog2.pop %v714
      %v761 = vmul.f32 %v760, 0.6931472
      %v762 = vlog2.pop %v717
      %v763 = vmul.f32 %v762, 0.6931472
      %v764 = vlog2.pop %v720
      %v765 = vmul.f32 %v764, 0.6931472
      %v766 = vlog2.pop %v723
      %v767 = vmul.f32 %v766, 0.6931472
      %v768 = vlog2.pop %v726
      %v769 = vmul.f32 %v768, 0.6931472
      %v770 = vlog2.pop %v729
      %v771 = vmul.f32 %v770, 0.6931472
      %v772 = vlog2.pop %v732
      %v773 = vmul.f32 %v772, 0.6931472
      %v774 = vlog2.pop %v735
      %v775 = vmul.f32 %v774, 0.6931472
      %v776 = vlog2.pop %v738
      %v777 = vmul.f32 %v776, 0.6931472
      %v778 = vlog2.pop %v741
      %v779 = vmul.f32 %v778, 0.6931472
      %v780 = vlog2.pop %v744
      %v781 = vmul.f32 %v780, 0.6931472
      %v782 = vlog2.pop %v747
      %v783 = vmul.f32 %v782, 0.6931472
      %v784 = vlog2.pop %v750
      %v785 = vmul.f32 %v784, 0.6931472
      %v786 = vlog2.pop %v753
      %v787 = vmul.f32 %v786, 0.6931472
      %v788 = vlog2.pop %v756
      %v789 = vmul.f32 %v788, 0.6931472
      %v790 = vlog2.pop %v759
      %v791 = vmul.f32 %v790, 0.6931472
      %v792 = vsub.f32 %v664, %v761
      %v793 = vsub.f32 %v665, %v763
      %v794 = vsub.f32 %v666, %v765
      %v795 = vsub.f32 %v667, %v767
      %v796 = vsub.f32 %v668, %v769
      %v797 = vsub.f32 %v669, %v771
      %v798 = vsub.f32 %v670, %v773
      %v799 = vsub.f32 %v671, %v775
      %v800 = vsub.f32 %v672, %v777
      %v801 = vsub.f32 %v673, %v779
      %v802 = vsub.f32 %v674, %v781
      %v803 = vsub.f32 %v675, %v783
      %v804 = vsub.f32 %v676, %v785
      %v805 = vsub.f32 %v677, %v787
      %v806 = vsub.f32 %v678, %v789
      %v807 = vsub.f32 %v679, %v791
      %v808 = vrcp.pop %v714
      %v809 = vmul.f32 %v681, %v808
      %v810 = vrcp.pop %v717
      %v811 = vmul.f32 %v683, %v810
      %v812 = vrcp.pop %v720
      %v813 = vmul.f32 %v685, %v812
      %v814 = vrcp.pop %v723
      %v815 = vmul.f32 %v687, %v814
      %v816 = vrcp.pop %v726
      %v817 = vmul.f32 %v689, %v816
      %v818 = vrcp.pop %v729
      %v819 = vmul.f32 %v691, %v818
      %v820 = vrcp.pop %v732
      %v821 = vmul.f32 %v693, %v820
      %v822 = vrcp.pop %v735
      %v823 = vmul.f32 %v695, %v822
      %v824 = vrcp.pop %v738
      %v825 = vmul.f32 %v697, %v824
      %v826 = vrcp.pop %v741
      %v827 = vmul.f32 %v699, %v826
      %v828 = vrcp.pop %v744
      %v829 = vmul.f32 %v701, %v828
      %v830 = vrcp.pop %v747
      %v831 = vmul.f32 %v703, %v830
      %v832 = vrcp.pop %v750
      %v833 = vmul.f32 %v705, %v832
      %v834 = vrcp.pop %v753
      %v835 = vmul.f32 %v707, %v834
      %v836 = vrcp.pop %v756
      %v837 = vmul.f32 %v709, %v836
      %v838 = vrcp.pop %v759
      %v839 = vmul.f32 %v711, %v838
      %v840 = vmul.f32 %v809, %v792
      %v841 = vmul.f32 %v811, %v793
      %v842 = vmul.f32 %v813, %v794
      %v843 = vmul.f32 %v815, %v795
      %v844 = vmul.f32 %v817, %v796
      %v845 = vmul.f32 %v819, %v797
      %v846 = vmul.f32 %v821, %v798
      %v847 = vmul.f32 %v823, %v799
      %v848 = vmul.f32 %v825, %v800
      %v849 = vmul.f32 %v827, %v801
      %v850 = vmul.f32 %v829, %v802
      %v851 = vmul.f32 %v831, %v803
      %v852 = vmul.f32 %v833, %v804
      %v853 = vmul.f32 %v835, %v805
      %v854 = vmul.f32 %v837, %v806
      %v855 = vmul.f32 %v839, %v807
      %v856 = vsel %vm615, %v840, 0.0
      %857 = vadd.xlane.f32.xlu0 %v856
      %v858 = vpop.xlane.xlu0 %857
      %v859 = vsel %vm615, %v841, 0.0
      %860 = vadd.xlane.f32.xlu0 %v859
      %v861 = vpop.xlane.xlu0 %860
      %v862 = vsel %vm615, %v842, 0.0
      %863 = vadd.xlane.f32.xlu0 %v862
      %v864 = vpop.xlane.xlu0 %863
      %v865 = vsel %vm615, %v843, 0.0
      %866 = vadd.xlane.f32.xlu0 %v865
      %v867 = vpop.xlane.xlu0 %866
      %v868 = vsel %vm615, %v844, 0.0
      %869 = vadd.xlane.f32.xlu0 %v868
      %v870 = vpop.xlane.xlu0 %869
      %v871 = vsel %vm615, %v845, 0.0
      %872 = vadd.xlane.f32.xlu0 %v871
      %v873 = vpop.xlane.xlu0 %872
      %v874 = vsel %vm615, %v846, 0.0
      %875 = vadd.xlane.f32.xlu0 %v874
      %v876 = vpop.xlane.xlu0 %875
      %v877 = vsel %vm615, %v847, 0.0
      %878 = vadd.xlane.f32.xlu0 %v877
      %v879 = vpop.xlane.xlu0 %878
      %v880 = vsel %vm615, %v848, 0.0
      %881 = vadd.xlane.f32.xlu0 %v880
      %v882 = vpop.xlane.xlu0 %881
      %v883 = vsel %vm615, %v849, 0.0
      %884 = vadd.xlane.f32.xlu0 %v883
      %v885 = vpop.xlane.xlu0 %884
      %v886 = vsel %vm615, %v850, 0.0
      %887 = vadd.xlane.f32.xlu0 %v886
      %v888 = vpop.xlane.xlu0 %887
      %v889 = vsel %vm615, %v851, 0.0
      %890 = vadd.xlane.f32.xlu0 %v889
      %v891 = vpop.xlane.xlu0 %890
      %v892 = vsel %vm615, %v852, 0.0
      %893 = vadd.xlane.f32.xlu0 %v892
      %v894 = vpop.xlane.xlu0 %893
      %v895 = vsel %vm615, %v853, 0.0
      %896 = vadd.xlane.f32.xlu0 %v895
      %v897 = vpop.xlane.xlu0 %896
      %v898 = vsel %vm615, %v854, 0.0
      %899 = vadd.xlane.f32.xlu0 %v898
      %v900 = vpop.xlane.xlu0 %899
      %v901 = vsel %vm615, %v855, 0.0
      %902 = vadd.xlane.f32.xlu0 %v901
      %v903 = vpop.xlane.xlu0 %902
      %v904 = vsub.f32 0.0, %v858
      %v905 = vsub.f32 0.0, %v861
      %v906 = vsub.f32 0.0, %v864
      %v907 = vsub.f32 0.0, %v867
      %v908 = vsub.f32 0.0, %v870
      %v909 = vsub.f32 0.0, %v873
      %v910 = vsub.f32 0.0, %v876
      %v911 = vsub.f32 0.0, %v879
      %v912 = vsub.f32 0.0, %v882
      %v913 = vsub.f32 0.0, %v885
      %v914 = vsub.f32 0.0, %v888
      %v915 = vsub.f32 0.0, %v891
      %v916 = vsub.f32 0.0, %v894
      %v917 = vsub.f32 0.0, %v897
      %v918 = vsub.f32 0.0, %v900
      %v919 = vsub.f32 0.0, %v903
      %v920 = vld [vmem:[%s215] sm:$0xff]
      %v921 = vld [vmem:[%s215 + $0x8] sm:$0xff]
      %v922 = vld [vmem:[%s215 + $0x10] sm:$0xff]
      %v923 = vld [vmem:[%s215 + $0x18] sm:$0xff]
      %v924 = vld [vmem:[%s215 + $0x20] sm:$0xff]
      %v925 = vld [vmem:[%s215 + $0x28] sm:$0xff]
      %v926 = vld [vmem:[%s215 + $0x30] sm:$0xff]
      %v927 = vld [vmem:[%s215 + $0x38] sm:$0xff]
      %v928 = vld [vmem:[%s215 + $0x40] sm:$0xff]
      %v929 = vld [vmem:[%s215 + $0x48] sm:$0xff]
      %v930 = vld [vmem:[%s215 + $0x50] sm:$0xff]
      %v931 = vld [vmem:[%s215 + $0x58] sm:$0xff]
      %v932 = vld [vmem:[%s215 + $0x60] sm:$0xff]
      %v933 = vld [vmem:[%s215 + $0x68] sm:$0xff]
      %v934 = vld [vmem:[%s215 + $0x70] sm:$0xff]
      %v935 = vld [vmem:[%s215 + $0x78] sm:$0xff]
      %v936 = vadd.f32 %v553, %v920
      %v937 = vadd.f32 %v556, %v921
      %v938 = vadd.f32 %v561, %v922
      %v939 = vadd.f32 %v564, %v923
      %v940 = vadd.f32 %v569, %v924
      %v941 = vadd.f32 %v572, %v925
      %v942 = vadd.f32 %v577, %v926
      %v943 = vadd.f32 %v580, %v927
      %v944 = vadd.f32 %v585, %v928
      %v945 = vadd.f32 %v588, %v929
      %v946 = vadd.f32 %v593, %v930
      %v947 = vadd.f32 %v596, %v931
      %v948 = vadd.f32 %v601, %v932
      %v949 = vadd.f32 %v604, %v933
      %v950 = vadd.f32 %v609, %v934
      %v951 = vadd.f32 %v612, %v935
      %v952 = vsel %vm615, %v936, -inf
      %953 = vmax.xlane.f32.xlu0 %v952
      %v954 = vpop.xlane.xlu0 %953
      %v955 = vsel %vm615, %v937, -inf
      %956 = vmax.xlane.f32.xlu0 %v955
      %v957 = vpop.xlane.xlu0 %956
      %v958 = vsel %vm615, %v938, -inf
      %959 = vmax.xlane.f32.xlu0 %v958
      %v960 = vpop.xlane.xlu0 %959
      %v961 = vsel %vm615, %v939, -inf
      %962 = vmax.xlane.f32.xlu0 %v961
      %v963 = vpop.xlane.xlu0 %962
      %v964 = vsel %vm615, %v940, -inf
      %965 = vmax.xlane.f32.xlu0 %v964
      %v966 = vpop.xlane.xlu0 %965
      %v967 = vsel %vm615, %v941, -inf
      %968 = vmax.xlane.f32.xlu0 %v967
      %v969 = vpop.xlane.xlu0 %968
      %v970 = vsel %vm615, %v942, -inf
      %971 = vmax.xlane.f32.xlu0 %v970
      %v972 = vpop.xlane.xlu0 %971
      %v973 = vsel %vm615, %v943, -inf
      %974 = vmax.xlane.f32.xlu0 %v973
      %v975 = vpop.xlane.xlu0 %974
      %v976 = vsel %vm615, %v944, -inf
      %977 = vmax.xlane.f32.xlu0 %v976
      %v978 = vpop.xlane.xlu0 %977
      %v979 = vsel %vm615, %v945, -inf
      %980 = vmax.xlane.f32.xlu0 %v979
      %v981 = vpop.xlane.xlu0 %980
      %v982 = vsel %vm615, %v946, -inf
      %983 = vmax.xlane.f32.xlu0 %v982
      %v984 = vpop.xlane.xlu0 %983
      %v985 = vsel %vm615, %v947, -inf
      %986 = vmax.xlane.f32.xlu0 %v985
      %v987 = vpop.xlane.xlu0 %986
      %v988 = vsel %vm615, %v948, -inf
      %989 = vmax.xlane.f32.xlu0 %v988
      %v990 = vpop.xlane.xlu0 %989
      %v991 = vsel %vm615, %v949, -inf
      %992 = vmax.xlane.f32.xlu0 %v991
      %v993 = vpop.xlane.xlu0 %992
      %v994 = vsel %vm615, %v950, -inf
      %995 = vmax.xlane.f32.xlu0 %v994
      %v996 = vpop.xlane.xlu0 %995
      %v997 = vsel %vm615, %v951, -inf
      %998 = vmax.xlane.f32.xlu0 %v997
      %v999 = vpop.xlane.xlu0 %998
      %v1000 = vlaneseq
      %v1001 = vand.u32 %v1000, 127
      %vm1002 = vcmp.eq.f32.partialorder %v936, %v954
      %vm1003 = vcmp.eq.f32.partialorder %v937, %v957
      %vm1004 = vcmp.eq.f32.partialorder %v938, %v960
      %vm1005 = vcmp.eq.f32.partialorder %v939, %v963
      %vm1006 = vcmp.eq.f32.partialorder %v940, %v966
      %vm1007 = vcmp.eq.f32.partialorder %v941, %v969
      %vm1008 = vcmp.eq.f32.partialorder %v942, %v972
      %vm1009 = vcmp.eq.f32.partialorder %v943, %v975
      %vm1010 = vcmp.eq.f32.partialorder %v944, %v978
      %vm1011 = vcmp.eq.f32.partialorder %v945, %v981
      %vm1012 = vcmp.eq.f32.partialorder %v946, %v984
      %vm1013 = vcmp.eq.f32.partialorder %v947, %v987
      %vm1014 = vcmp.eq.f32.partialorder %v948, %v990
      %vm1015 = vcmp.eq.f32.partialorder %v949, %v993
      %vm1016 = vcmp.eq.f32.partialorder %v950, %v996
      %vm1017 = vcmp.eq.f32.partialorder %v951, %v999
      %v1018 = vsel %vm1002, %v1001, 8
      %v1019 = vsel %vm1003, %v1001, 8
      %v1020 = vsel %vm1004, %v1001, 8
      %v1021 = vsel %vm1005, %v1001, 8
      %v1022 = vsel %vm1006, %v1001, 8
      %v1023 = vsel %vm1007, %v1001, 8
      %v1024 = vsel %vm1008, %v1001, 8
      %v1025 = vsel %vm1009, %v1001, 8
      %v1026 = vsel %vm1010, %v1001, 8
      %v1027 = vsel %vm1011, %v1001, 8
      %v1028 = vsel %vm1012, %v1001, 8
      %v1029 = vsel %vm1013, %v1001, 8
      %v1030 = vsel %vm1014, %v1001, 8
      %v1031 = vsel %vm1015, %v1001, 8
      %v1032 = vsel %vm1016, %v1001, 8
      %v1033 = vsel %vm1017, %v1001, 8
      %v1034 = vsel %vm615, %v1018, 2147483647
      %v1035 = vand.u32 %v1034, 65535
      %v1036 = vshra.s32 %v1034, 16
      %v1037 = vcvt.s32.f32 %v1035
      %v1038 = vcvt.s32.f32 %v1036
      %1039 = vmin.xlane.f32.xlu0 %v1038
      %v1040 = vpop.xlane.xlu0 %1039
      %vm1041 = vcmp.eq.f32.partialorder %v1038, %v1040
      %v1042 = vsel %vm1041, %v1037, inf
      %1043 = vmin.xlane.f32.xlu0 %v1042
      %v1044 = vpop.xlane.xlu0 %1043
      %v1045 = vcvt.f32.s32 %v1044
      %v1046 = vcvt.f32.s32 %v1040
      %v1047 = vshll.u32 %v1046, 16
      %v1048 = vadd.s32 %v1047, %v1045
      %v1049 = vsel %vm615, %v1019, 2147483647
      %v1050 = vand.u32 %v1049, 65535
      %v1051 = vshra.s32 %v1049, 16
      %v1052 = vcvt.s32.f32 %v1050
      %v1053 = vcvt.s32.f32 %v1051
      %1054 = vmin.xlane.f32.xlu0 %v1053
      %v1055 = vpop.xlane.xlu0 %1054
      %vm1056 = vcmp.eq.f32.partialorder %v1053, %v1055
      %v1057 = vsel %vm1056, %v1052, inf
      %1058 = vmin.xlane.f32.xlu0 %v1057
      %v1059 = vpop.xlane.xlu0 %1058
      %v1060 = vcvt.f32.s32 %v1059
      %v1061 = vcvt.f32.s32 %v1055
      %v1062 = vshll.u32 %v1061, 16
      %v1063 = vadd.s32 %v1062, %v1060
      %v1064 = vsel %vm615, %v1020, 2147483647
      %v1065 = vand.u32 %v1064, 65535
      %v1066 = vshra.s32 %v1064, 16
      %v1067 = vcvt.s32.f32 %v1065
      %v1068 = vcvt.s32.f32 %v1066
      %1069 = vmin.xlane.f32.xlu0 %v1068
      %v1070 = vpop.xlane.xlu0 %1069
      %vm1071 = vcmp.eq.f32.partialorder %v1068, %v1070
      %v1072 = vsel %vm1071, %v1067, inf
      %1073 = vmin.xlane.f32.xlu0 %v1072
      %v1074 = vpop.xlane.xlu0 %1073
      %v1075 = vcvt.f32.s32 %v1074
      %v1076 = vcvt.f32.s32 %v1070
      %v1077 = vshll.u32 %v1076, 16
      %v1078 = vadd.s32 %v1077, %v1075
      %v1079 = vsel %vm615, %v1021, 2147483647
      %v1080 = vand.u32 %v1079, 65535
      %v1081 = vshra.s32 %v1079, 16
      %v1082 = vcvt.s32.f32 %v1080
      %v1083 = vcvt.s32.f32 %v1081
      %1084 = vmin.xlane.f32.xlu0 %v1083
      %v1085 = vpop.xlane.xlu0 %1084
      %vm1086 = vcmp.eq.f32.partialorder %v1083, %v1085
      %v1087 = vsel %vm1086, %v1082, inf
      %1088 = vmin.xlane.f32.xlu0 %v1087
      %v1089 = vpop.xlane.xlu0 %1088
      %v1090 = vcvt.f32.s32 %v1089
      %v1091 = vcvt.f32.s32 %v1085
      %v1092 = vshll.u32 %v1091, 16
      %v1093 = vadd.s32 %v1092, %v1090
      %v1094 = vsel %vm615, %v1022, 2147483647
      %v1095 = vand.u32 %v1094, 65535
      %v1096 = vshra.s32 %v1094, 16
      %v1097 = vcvt.s32.f32 %v1095
      %v1098 = vcvt.s32.f32 %v1096
      %1099 = vmin.xlane.f32.xlu0 %v1098
      %v1100 = vpop.xlane.xlu0 %1099
      %vm1101 = vcmp.eq.f32.partialorder %v1098, %v1100
      %v1102 = vsel %vm1101, %v1097, inf
      %1103 = vmin.xlane.f32.xlu0 %v1102
      %v1104 = vpop.xlane.xlu0 %1103
      %v1105 = vcvt.f32.s32 %v1104
      %v1106 = vcvt.f32.s32 %v1100
      %v1107 = vshll.u32 %v1106, 16
      %v1108 = vadd.s32 %v1107, %v1105
      %v1109 = vsel %vm615, %v1023, 2147483647
      %v1110 = vand.u32 %v1109, 65535
      %v1111 = vshra.s32 %v1109, 16
      %v1112 = vcvt.s32.f32 %v1110
      %v1113 = vcvt.s32.f32 %v1111
      %1114 = vmin.xlane.f32.xlu0 %v1113
      %v1115 = vpop.xlane.xlu0 %1114
      %vm1116 = vcmp.eq.f32.partialorder %v1113, %v1115
      %v1117 = vsel %vm1116, %v1112, inf
      %1118 = vmin.xlane.f32.xlu0 %v1117
      %v1119 = vpop.xlane.xlu0 %1118
      %v1120 = vcvt.f32.s32 %v1119
      %v1121 = vcvt.f32.s32 %v1115
      %v1122 = vshll.u32 %v1121, 16
      %v1123 = vadd.s32 %v1122, %v1120
      %v1124 = vsel %vm615, %v1024, 2147483647
      %v1125 = vand.u32 %v1124, 65535
      %v1126 = vshra.s32 %v1124, 16
      %v1127 = vcvt.s32.f32 %v1125
      %v1128 = vcvt.s32.f32 %v1126
      %1129 = vmin.xlane.f32.xlu0 %v1128
      %v1130 = vpop.xlane.xlu0 %1129
      %vm1131 = vcmp.eq.f32.partialorder %v1128, %v1130
      %v1132 = vsel %vm1131, %v1127, inf
      %1133 = vmin.xlane.f32.xlu0 %v1132
      %v1134 = vpop.xlane.xlu0 %1133
      %v1135 = vcvt.f32.s32 %v1134
      %v1136 = vcvt.f32.s32 %v1130
      %v1137 = vshll.u32 %v1136, 16
      %v1138 = vadd.s32 %v1137, %v1135
      %v1139 = vsel %vm615, %v1025, 2147483647
      %v1140 = vand.u32 %v1139, 65535
      %v1141 = vshra.s32 %v1139, 16
      %v1142 = vcvt.s32.f32 %v1140
      %v1143 = vcvt.s32.f32 %v1141
      %1144 = vmin.xlane.f32.xlu0 %v1143
      %v1145 = vpop.xlane.xlu0 %1144
      %vm1146 = vcmp.eq.f32.partialorder %v1143, %v1145
      %v1147 = vsel %vm1146, %v1142, inf
      %1148 = vmin.xlane.f32.xlu0 %v1147
      %v1149 = vpop.xlane.xlu0 %1148
      %v1150 = vcvt.f32.s32 %v1149
      %v1151 = vcvt.f32.s32 %v1145
      %v1152 = vshll.u32 %v1151, 16
      %v1153 = vadd.s32 %v1152, %v1150
      %v1154 = vsel %vm615, %v1026, 2147483647
      %v1155 = vand.u32 %v1154, 65535
      %v1156 = vshra.s32 %v1154, 16
      %v1157 = vcvt.s32.f32 %v1155
      %v1158 = vcvt.s32.f32 %v1156
      %1159 = vmin.xlane.f32.xlu0 %v1158
      %v1160 = vpop.xlane.xlu0 %1159
      %vm1161 = vcmp.eq.f32.partialorder %v1158, %v1160
      %v1162 = vsel %vm1161, %v1157, inf
      %1163 = vmin.xlane.f32.xlu0 %v1162
      %v1164 = vpop.xlane.xlu0 %1163
      %v1165 = vcvt.f32.s32 %v1164
      %v1166 = vcvt.f32.s32 %v1160
      %v1167 = vshll.u32 %v1166, 16
      %v1168 = vadd.s32 %v1167, %v1165
      %v1169 = vsel %vm615, %v1027, 2147483647
      %v1170 = vand.u32 %v1169, 65535
      %v1171 = vshra.s32 %v1169, 16
      %v1172 = vcvt.s32.f32 %v1170
      %v1173 = vcvt.s32.f32 %v1171
      %1174 = vmin.xlane.f32.xlu0 %v1173
      %v1175 = vpop.xlane.xlu0 %1174
      %vm1176 = vcmp.eq.f32.partialorder %v1173, %v1175
      %v1177 = vsel %vm1176, %v1172, inf
      %1178 = vmin.xlane.f32.xlu0 %v1177
      %v1179 = vpop.xlane.xlu0 %1178
      %v1180 = vcvt.f32.s32 %v1179
      %v1181 = vcvt.f32.s32 %v1175
      %v1182 = vshll.u32 %v1181, 16
      %v1183 = vadd.s32 %v1182, %v1180
      %v1184 = vsel %vm615, %v1028, 2147483647
      %v1185 = vand.u32 %v1184, 65535
      %v1186 = vshra.s32 %v1184, 16
      %v1187 = vcvt.s32.f32 %v1185
      %v1188 = vcvt.s32.f32 %v1186
      %1189 = vmin.xlane.f32.xlu0 %v1188
      %v1190 = vpop.xlane.xlu0 %1189
      %vm1191 = vcmp.eq.f32.partialorder %v1188, %v1190
      %v1192 = vsel %vm1191, %v1187, inf
      %1193 = vmin.xlane.f32.xlu0 %v1192
      %v1194 = vpop.xlane.xlu0 %1193
      %v1195 = vcvt.f32.s32 %v1194
      %v1196 = vcvt.f32.s32 %v1190
      %v1197 = vshll.u32 %v1196, 16
      %v1198 = vadd.s32 %v1197, %v1195
      %v1199 = vsel %vm615, %v1029, 2147483647
      %v1200 = vand.u32 %v1199, 65535
      %v1201 = vshra.s32 %v1199, 16
      %v1202 = vcvt.s32.f32 %v1200
      %v1203 = vcvt.s32.f32 %v1201
      %1204 = vmin.xlane.f32.xlu0 %v1203
      %v1205 = vpop.xlane.xlu0 %1204
      %vm1206 = vcmp.eq.f32.partialorder %v1203, %v1205
      %v1207 = vsel %vm1206, %v1202, inf
      %1208 = vmin.xlane.f32.xlu0 %v1207
      %v1209 = vpop.xlane.xlu0 %1208
      %v1210 = vcvt.f32.s32 %v1209
      %v1211 = vcvt.f32.s32 %v1205
      %v1212 = vshll.u32 %v1211, 16
      %v1213 = vadd.s32 %v1212, %v1210
      %v1214 = vsel %vm615, %v1030, 2147483647
      %v1215 = vand.u32 %v1214, 65535
      %v1216 = vshra.s32 %v1214, 16
      %v1217 = vcvt.s32.f32 %v1215
      %v1218 = vcvt.s32.f32 %v1216
      %1219 = vmin.xlane.f32.xlu0 %v1218
      %v1220 = vpop.xlane.xlu0 %1219
      %vm1221 = vcmp.eq.f32.partialorder %v1218, %v1220
      %v1222 = vsel %vm1221, %v1217, inf
      %1223 = vmin.xlane.f32.xlu0 %v1222
      %v1224 = vpop.xlane.xlu0 %1223
      %v1225 = vcvt.f32.s32 %v1224
      %v1226 = vcvt.f32.s32 %v1220
      %v1227 = vshll.u32 %v1226, 16
      %v1228 = vadd.s32 %v1227, %v1225
      %v1229 = vsel %vm615, %v1031, 2147483647
      %v1230 = vand.u32 %v1229, 65535
      %v1231 = vshra.s32 %v1229, 16
      %v1232 = vcvt.s32.f32 %v1230
      %v1233 = vcvt.s32.f32 %v1231
      %1234 = vmin.xlane.f32.xlu0 %v1233
      %v1235 = vpop.xlane.xlu0 %1234
      %vm1236 = vcmp.eq.f32.partialorder %v1233, %v1235
      %v1237 = vsel %vm1236, %v1232, inf
      %1238 = vmin.xlane.f32.xlu0 %v1237
      %v1239 = vpop.xlane.xlu0 %1238
      %v1240 = vcvt.f32.s32 %v1239
      %v1241 = vcvt.f32.s32 %v1235
      %v1242 = vshll.u32 %v1241, 16
      %v1243 = vadd.s32 %v1242, %v1240
      %v1244 = vsel %vm615, %v1032, 2147483647
      %v1245 = vand.u32 %v1244, 65535
      %v1246 = vshra.s32 %v1244, 16
      %v1247 = vcvt.s32.f32 %v1245
      %v1248 = vcvt.s32.f32 %v1246
      %1249 = vmin.xlane.f32.xlu0 %v1248
      %v1250 = vpop.xlane.xlu0 %1249
      %vm1251 = vcmp.eq.f32.partialorder %v1248, %v1250
      %v1252 = vsel %vm1251, %v1247, inf
      %1253 = vmin.xlane.f32.xlu0 %v1252
      %v1254 = vpop.xlane.xlu0 %1253
      %v1255 = vcvt.f32.s32 %v1254
      %v1256 = vcvt.f32.s32 %v1250
      %v1257 = vshll.u32 %v1256, 16
      %v1258 = vadd.s32 %v1257, %v1255
      %v1259 = vsel %vm615, %v1033, 2147483647
      %v1260 = vand.u32 %v1259, 65535
      %v1261 = vshra.s32 %v1259, 16
      %v1262 = vcvt.s32.f32 %v1260
      %v1263 = vcvt.s32.f32 %v1261
      %1264 = vmin.xlane.f32.xlu0 %v1263
      %v1265 = vpop.xlane.xlu0 %1264
      %vm1266 = vcmp.eq.f32.partialorder %v1263, %v1265
      %v1267 = vsel %vm1266, %v1262, inf
      %1268 = vmin.xlane.f32.xlu0 %v1267
      %v1269 = vpop.xlane.xlu0 %1268
      %v1270 = vcvt.f32.s32 %v1269
      %v1271 = vcvt.f32.s32 %v1265
      %v1272 = vshll.u32 %v1271, 16
      %v1273 = vadd.s32 %v1272, %v1270
      %vm1274 = vcmp.eq.s32.totalorder %v1001, %v1048
      %vm1275 = vcmp.eq.s32.totalorder %v1001, %v1063
      %vm1276 = vcmp.eq.s32.totalorder %v1001, %v1078
      %vm1277 = vcmp.eq.s32.totalorder %v1001, %v1093
      %vm1278 = vcmp.eq.s32.totalorder %v1001, %v1108
      %vm1279 = vcmp.eq.s32.totalorder %v1001, %v1123
      %vm1280 = vcmp.eq.s32.totalorder %v1001, %v1138
      %vm1281 = vcmp.eq.s32.totalorder %v1001, %v1153
      %vm1282 = vcmp.eq.s32.totalorder %v1001, %v1168
      %vm1283 = vcmp.eq.s32.totalorder %v1001, %v1183
      %vm1284 = vcmp.eq.s32.totalorder %v1001, %v1198
      %vm1285 = vcmp.eq.s32.totalorder %v1001, %v1213
      %vm1286 = vcmp.eq.s32.totalorder %v1001, %v1228
      %vm1287 = vcmp.eq.s32.totalorder %v1001, %v1243
      %vm1288 = vcmp.eq.s32.totalorder %v1001, %v1258
      %vm1289 = vcmp.eq.s32.totalorder %v1001, %v1273
      %v1290 = vsel %vm1274, %v792, 0.0
      %v1291 = vsel %vm1275, %v793, 0.0
      %v1292 = vsel %vm1276, %v794, 0.0
      %v1293 = vsel %vm1277, %v795, 0.0
      %v1294 = vsel %vm1278, %v796, 0.0
      %v1295 = vsel %vm1279, %v797, 0.0
      %v1296 = vsel %vm1280, %v798, 0.0
      %v1297 = vsel %vm1281, %v799, 0.0
      %v1298 = vsel %vm1282, %v800, 0.0
      %v1299 = vsel %vm1283, %v801, 0.0
      %v1300 = vsel %vm1284, %v802, 0.0
      %v1301 = vsel %vm1285, %v803, 0.0
      %v1302 = vsel %vm1286, %v804, 0.0
      %v1303 = vsel %vm1287, %v805, 0.0
      %v1304 = vsel %vm1288, %v806, 0.0
      %v1305 = vsel %vm1289, %v807, 0.0
      %v1306 = vsel %vm615, %v1290, 0.0
      %1307 = vadd.xlane.f32.xlu0 %v1306
      %v1308 = vpop.xlane.xlu0 %1307
      %v1309 = vsel %vm615, %v1291, 0.0
      %1310 = vadd.xlane.f32.xlu0 %v1309
      %v1311 = vpop.xlane.xlu0 %1310
      %v1312 = vsel %vm615, %v1292, 0.0
      %1313 = vadd.xlane.f32.xlu0 %v1312
      %v1314 = vpop.xlane.xlu0 %1313
      %v1315 = vsel %vm615, %v1293, 0.0
      %1316 = vadd.xlane.f32.xlu0 %v1315
      %v1317 = vpop.xlane.xlu0 %1316
      %v1318 = vsel %vm615, %v1294, 0.0
      %1319 = vadd.xlane.f32.xlu0 %v1318
      %v1320 = vpop.xlane.xlu0 %1319
      %v1321 = vsel %vm615, %v1295, 0.0
      %1322 = vadd.xlane.f32.xlu0 %v1321
      %v1323 = vpop.xlane.xlu0 %1322
      %v1324 = vsel %vm615, %v1296, 0.0
      %1325 = vadd.xlane.f32.xlu0 %v1324
      %v1326 = vpop.xlane.xlu0 %1325
      %v1327 = vsel %vm615, %v1297, 0.0
      %1328 = vadd.xlane.f32.xlu0 %v1327
      %v1329 = vpop.xlane.xlu0 %1328
      %v1330 = vsel %vm615, %v1298, 0.0
      %1331 = vadd.xlane.f32.xlu0 %v1330
      %v1332 = vpop.xlane.xlu0 %1331
      %v1333 = vsel %vm615, %v1299, 0.0
      %1334 = vadd.xlane.f32.xlu0 %v1333
      %v1335 = vpop.xlane.xlu0 %1334
      %v1336 = vsel %vm615, %v1300, 0.0
      %1337 = vadd.xlane.f32.xlu0 %v1336
      %v1338 = vpop.xlane.xlu0 %1337
      %v1339 = vsel %vm615, %v1301, 0.0
      %1340 = vadd.xlane.f32.xlu0 %v1339
      %v1341 = vpop.xlane.xlu0 %1340
      %v1342 = vsel %vm615, %v1302, 0.0
      %1343 = vadd.xlane.f32.xlu0 %v1342
      %v1344 = vpop.xlane.xlu0 %1343
      %v1345 = vsel %vm615, %v1303, 0.0
      %1346 = vadd.xlane.f32.xlu0 %v1345
      %v1347 = vpop.xlane.xlu0 %1346
      %v1348 = vsel %vm615, %v1304, 0.0
      %1349 = vadd.xlane.f32.xlu0 %v1348
      %v1350 = vpop.xlane.xlu0 %1349
      %v1351 = vsel %vm615, %v1305, 0.0
      %1352 = vadd.xlane.f32.xlu0 %v1351
      %v1353 = vpop.xlane.xlu0 %1352
      %v1354 = vcvt.s32.f32 %v1048
      %v1355 = vcvt.s32.f32 %v1063
      %v1356 = vcvt.s32.f32 %v1078
      %v1357 = vcvt.s32.f32 %v1093
      %v1358 = vcvt.s32.f32 %v1108
      %v1359 = vcvt.s32.f32 %v1123
      %v1360 = vcvt.s32.f32 %v1138
      %v1361 = vcvt.s32.f32 %v1153
      %v1362 = vcvt.s32.f32 %v1168
      %v1363 = vcvt.s32.f32 %v1183
      %v1364 = vcvt.s32.f32 %v1198
      %v1365 = vcvt.s32.f32 %v1213
      %v1366 = vcvt.s32.f32 %v1228
      %v1367 = vcvt.s32.f32 %v1243
      %v1368 = vcvt.s32.f32 %v1258
      %v1369 = vcvt.s32.f32 %v1273
      %1386 = vrot.lane.b32.xlu0 %v553, 123
      %v1387 = vpop.permute.xlu0 %1386
      %1388 = vrot.lane.b32.xlu0 %v556, 123
      %v1389 = vpop.permute.xlu0 %1388
      %1390 = vrot.lane.b32.xlu0 %v561, 123
      %v1391 = vpop.permute.xlu0 %1390
      %1392 = vrot.lane.b32.xlu0 %v564, 123
      %v1393 = vpop.permute.xlu0 %1392
      %1394 = vrot.lane.b32.xlu0 %v569, 123
      %v1395 = vpop.permute.xlu0 %1394
      %1396 = vrot.lane.b32.xlu0 %v572, 123
      %v1397 = vpop.permute.xlu0 %1396
      %1398 = vrot.lane.b32.xlu0 %v577, 123
      %v1399 = vpop.permute.xlu0 %1398
      %1400 = vrot.lane.b32.xlu0 %v580, 123
      %v1401 = vpop.permute.xlu0 %1400
      %1402 = vrot.lane.b32.xlu0 %v585, 123
      %v1403 = vpop.permute.xlu0 %1402
      %1404 = vrot.lane.b32.xlu0 %v588, 123
      %v1405 = vpop.permute.xlu0 %1404
      %1406 = vrot.lane.b32.xlu0 %v593, 123
      %v1407 = vpop.permute.xlu0 %1406
      %1408 = vrot.lane.b32.xlu0 %v596, 123
      %v1409 = vpop.permute.xlu0 %1408
      %1410 = vrot.lane.b32.xlu0 %v601, 123
      %v1411 = vpop.permute.xlu0 %1410
      %1412 = vrot.lane.b32.xlu0 %v604, 123
      %v1413 = vpop.permute.xlu0 %1412
      %1414 = vrot.lane.b32.xlu0 %v609, 123
      %v1415 = vpop.permute.xlu0 %1414
      %1416 = vrot.lane.b32.xlu0 %v612, 123
      %v1417 = vpop.permute.xlu0 %1416
      %vm1434 = vcmask 7168
      %v1435 = vsel %vm1434, %v1354, %v1308
      %v1436 = vsel %vm1434, %v1355, %v1311
      %v1437 = vsel %vm1434, %v1356, %v1314
      %v1438 = vsel %vm1434, %v1357, %v1317
      %v1439 = vsel %vm1434, %v1358, %v1320
      %v1440 = vsel %vm1434, %v1359, %v1323
      %v1441 = vsel %vm1434, %v1360, %v1326
      %v1442 = vsel %vm1434, %v1361, %v1329
      %v1443 = vsel %vm1434, %v1362, %v1332
      %v1444 = vsel %vm1434, %v1363, %v1335
      %v1445 = vsel %vm1434, %v1364, %v1338
      %v1446 = vsel %vm1434, %v1365, %v1341
      %v1447 = vsel %vm1434, %v1366, %v1344
      %v1448 = vsel %vm1434, %v1367, %v1347
      %v1449 = vsel %vm1434, %v1368, %v1350
      %v1450 = vsel %vm1434, %v1369, %v1353
      %vm1451 = vcmask 15360
      %v1452 = vsel %vm1451, %v1435, %v904
      %v1453 = vsel %vm1451, %v1436, %v905
      %v1454 = vsel %vm1451, %v1437, %v906
      %v1455 = vsel %vm1451, %v1438, %v907
      %v1456 = vsel %vm1451, %v1439, %v908
      %v1457 = vsel %vm1451, %v1440, %v909
      %v1458 = vsel %vm1451, %v1441, %v910
      %v1459 = vsel %vm1451, %v1442, %v911
      %v1460 = vsel %vm1451, %v1443, %v912
      %v1461 = vsel %vm1451, %v1444, %v913
      %v1462 = vsel %vm1451, %v1445, %v914
      %v1463 = vsel %vm1451, %v1446, %v915
      %v1464 = vsel %vm1451, %v1447, %v916
      %v1465 = vsel %vm1451, %v1448, %v917
      %v1466 = vsel %vm1451, %v1449, %v918
      %v1467 = vsel %vm1451, %v1450, %v919
      %vm1468 = vcmask 23552
      %v1469 = vsel %vm1468, %v1452, %v1387
      %v1470 = vsel %vm1468, %v1453, %v1389
      %v1471 = vsel %vm1468, %v1454, %v1391
      %v1472 = vsel %vm1468, %v1455, %v1393
      %v1473 = vsel %vm1468, %v1456, %v1395
      %v1474 = vsel %vm1468, %v1457, %v1397
      %v1475 = vsel %vm1468, %v1458, %v1399
      %v1476 = vsel %vm1468, %v1459, %v1401
      %v1477 = vsel %vm1468, %v1460, %v1403
      %v1478 = vsel %vm1468, %v1461, %v1405
      %v1479 = vsel %vm1468, %v1462, %v1407
      %v1480 = vsel %vm1468, %v1463, %v1409
      %v1481 = vsel %vm1468, %v1464, %v1411
      %v1482 = vsel %vm1468, %v1465, %v1413
      %v1483 = vsel %vm1468, %v1466, %v1415
      %v1484 = vsel %vm1468, %v1467, %v1417
      %vm1485 = vcmask 31744
      %1486 = vst.msk [vmem:[%s221] sm:$0xff] %vm1485, %v1469
      %1487 = vst.msk [vmem:[%s221 + $0x8] sm:$0xff] %vm1485, %v1470
      %1488 = vst.msk [vmem:[%s221 + $0x10] sm:$0xff] %vm1485, %v1471
      %1489 = vst.msk [vmem:[%s221 + $0x18] sm:$0xff] %vm1485, %v1472
      %1490 = vst.msk [vmem:[%s221 + $0x20] sm:$0xff] %vm1485, %v1473
      %1491 = vst.msk [vmem:[%s221 + $0x28] sm:$0xff] %vm1485, %v1474
      %1492 = vst.msk [vmem:[%s221 + $0x30] sm:$0xff] %vm1485, %v1475
      %1493 = vst.msk [vmem:[%s221 + $0x38] sm:$0xff] %vm1485, %v1476
      %1494 = vst.msk [vmem:[%s221 + $0x40] sm:$0xff] %vm1485, %v1477
      %1495 = vst.msk [vmem:[%s221 + $0x48] sm:$0xff] %vm1485, %v1478
      %1496 = vst.msk [vmem:[%s221 + $0x50] sm:$0xff] %vm1485, %v1479
      %1497 = vst.msk [vmem:[%s221 + $0x58] sm:$0xff] %vm1485, %v1480
      %1498 = vst.msk [vmem:[%s221 + $0x60] sm:$0xff] %vm1485, %v1481
      %1499 = vst.msk [vmem:[%s221 + $0x68] sm:$0xff] %vm1485, %v1482
      %1500 = vst.msk [vmem:[%s221 + $0x70] sm:$0xff] %vm1485, %v1483
      %1501 = vst.msk [vmem:[%s221 + $0x78] sm:$0xff] %vm1485, %v1484
      %s1502 = smul.u32 16, %s15
      %p1503 = scmp.lt.s32.totalorder %s1502, 31
      %s1504 = scalar_select %p1503, %s1502, 31
      %s1505 = smul.addr %s1504, 8
      %s1506 = scalar_lea.vmem %s4, %s1505
      // Predicated region
      $region37: #{ac_forward.1} parent=35 // pred_check
        %p1507 = pneg %p127
      $region38: #{ac_forward.1} parent=35 // pred_check_branch
        %1509 = sbr.rel (%p1507) target = $region40
      $region39: #{ac_forward.1} parent=35 // pred_region
        %s1510 = smul.u32 16, %s15
      $region40: #{ac_forward.1} parent=35 // pred_fallthru
        _
    $region36: #{ac_forward.1} parent=5 // pred_fallthru
      _
    %p1511 = scmp.le.s32.totalorder 2, %s10
    // Predicated region
    $region41: #{ac_forward.1} parent=5 // pred_check
      %p1512 = pneg %p1511
    $region42: #{ac_forward.1} parent=5 // pred_check_branch
      %1514 = sbr.rel (%p1512) target = $region44
    $region43: #{ac_forward.1} parent=5 // pred_region
      %s1515 = ssub.s32 %s10, 2
      // Predicated region
      $region45: #{ac_forward.1} parent=43 // pred_check
        %p1516 = pneg %p133
      $region46: #{ac_forward.1} parent=43 // pred_check_branch
        %1518 = sbr.rel (%p1516) target = $region48
      $region47: #{ac_forward.1} parent=43 // pred_region
        %s1519 = smul.u32 16, %s16
        %p1520 = scmp.lt.s32.totalorder %s1519, 31
        %s1521 = scalar_select %p1520, %s1519, 31
        %s1522 = smul.addr %s1521, 8
        %s1523 = scalar_lea.vmem %s4, %s1522
      $region48: #{ac_forward.1} parent=43 // pred_fallthru
        _
    $region44: #{ac_forward.1} parent=5 // pred_fallthru
      _
  $region6: #{ac_forward.1} parent=0 // loop_footer
    %s14 = sadd.s32 1, %s10
  $region7: #{ac_forward.1} parent=0 // loop_footer_branch
    %9 = sbr.rel target = $region3
  $region8: #{ac_forward.1} parent=0 // loop_exit
    _

</llo_original>
